<compile_context>
chip_gen: v5e
topology: v5e:2x2
jax: 0.10.0
libtpu: 0.0.40
codegen_flags: <defaults>
</compile_context>

<pallas_src>
import functools

import jax
import jax.numpy as jnp
from jax.experimental import pallas as pl
from jax.experimental.pallas import tpu as pltpu


def _round_up(x, m):
    return ((x + m - 1) // m) * m


def _leaky_relu(x, slope=0.01):
    return jnp.where(x > 0, x, slope * x)


def _linear(x, w_ref, b_ref, compute_dtype):
    # x: (B, in) f32, w: (in, out), b: (1, out) f32. bf16 MXU inputs, f32 accumulate.
    y = jnp.dot(x.astype(compute_dtype), w_ref[...].astype(compute_dtype),
                preferred_element_type=jnp.float32)
    return y + b_ref[...].astype(jnp.float32)


def _mlp4(x, refs, compute_dtype):
    # refs = (w1, b1, w2, b2, w3, b3, w4, b4)
    h = x
    for i in range(4):
        h = _leaky_relu(_linear(h, refs[2 * i], refs[2 * i + 1], compute_dtype))
    return h


def _make_stage1_kernel(tb, b_actual, compute_dtype):
    def kernel(x_pi_ref, x_beta_ref,
               w11, b11, w12, b12, w13, b13, w14, b14,
               w21, b21, w22, b22, w23, b23, w24, b24,
               w_pi, b_pi,
               pi_ref, h_beta_ref, psum_ref, pssq_ref):
        x_pi = x_pi_ref[...].astype(jnp.float32)
        x_beta = x_beta_ref[...].astype(jnp.float32)

        # --- pi branch (fully per-tile independent) ---
        h_pi = _mlp4(x_pi, (w11, b11, w12, b12, w13, b13, w14, b14), compute_dtype)
        pi = jax.nn.sigmoid(_linear(h_pi, w_pi, b_pi, compute_dtype))
        pi_ref[...] = pi.astype(pi_ref.dtype)

        # --- beta branch: MLP only; BatchNorm needs full-batch stats (stage 2) ---
        h_beta = _mlp4(x_beta, (w21, b21, w22, b22, w23, b23, w24, b24), compute_dtype)
        h_beta_ref[...] = h_beta.astype(h_beta_ref.dtype)

        # Per-tile partial BatchNorm statistics, masking out zero-padded batch rows.
        hid = h_beta.shape[1]
        row = (pl.program_id(0) * tb
               + jax.lax.broadcasted_iota(jnp.int32, h_beta.shape, 0))
        valid = (row < b_actual).astype(jnp.float32)
        hb = h_beta * valid
        psum_ref[...] = jnp.sum(hb, axis=0, keepdims=True).reshape(1, 1, hid)
        pssq_ref[...] = jnp.sum(hb * h_beta, axis=0, keepdims=True).reshape(1, 1, hid)

    return kernel


def _make_stage2_kernel(b_actual, img_dim, compute_dtype):
    inv_n = 1.0 / float(b_actual)
    eps = 1e-5

    def kernel(h_beta_ref, bn_sum_ref, bn_ssq_ref, gamma_ref, bnb_ref,
               w_bs_ref, b_bs_ref, out_ref):
        h = h_beta_ref[...].astype(jnp.float32)

        # Global batch statistics (training-mode BatchNorm1d, biased variance).
        mean = bn_sum_ref[...] * inv_n                                  # (1, 128)
        var = jnp.maximum(bn_ssq_ref[...] * inv_n - mean * mean, 0.0)   # (1, 128)
        inv_std = jax.lax.rsqrt(var + eps)
        scale = gamma_ref[...].astype(jnp.float32) * inv_std
        shift = bnb_ref[...].astype(jnp.float32) - mean * scale
        h_bn = h * scale + shift

        # Fused [linear_beta | linear_std] head -> single lane-dense output slab.
        y = jnp.dot(h_bn.astype(compute_dtype), w_bs_ref[...].astype(compute_dtype),
                    preferred_element_type=jnp.float32) + b_bs_ref[...].astype(jnp.float32)
        col = jax.lax.broadcasted_iota(jnp.int32, y.shape, 1)
        out = jnp.where(col < img_dim, y, 3.0 * jax.nn.sigmoid(y))
        out_ref[...] = out.astype(out_ref.dtype)

    return kernel


def plain_generator_forward(x_pi, x_beta, params, *, block_b=512,
                            compute_dtype=jnp.bfloat16):
    """params: flat tuple (mlp1 x8, mlp2 x8, bn_gamma, bn_beta, heads x6)."""
    (w11, b11, w12, b12, w13, b13, w14, b14,
     w21, b21, w22, b22, w23, b23, w24, b24,
     bn_gamma, bn_beta,
     w_pi, b_pi, w_beta, b_beta, w_std, b_std) = params

    B, base_dim = x_pi.shape
    img_dim = w_pi.shape[1]
    hid = w14.shape[1]  # 128

    # Batch tile: biggest tile that fits comfortably in VMEM. block_b=512 is safe on
    # v5e/v6e (128 MiB VMEM) and v7x (64 MiB); bump to 1024-2048 for large batches on
    # v5e/v6e if desired.
    tb = min(block_b, _round_up(B, 8))
    b_pad = _round_up(B, tb)
    g = b_pad // tb

    if b_pad != B:
        pad = ((0, b_pad - B), (0, 0))
        x_pi_p = jnp.pad(x_pi, pad)
        x_beta_p = jnp.pad(x_beta, pad)
    else:
        x_pi_p, x_beta_p = x_pi, x_beta

    def tile_spec(feat):
        return pl.BlockSpec((tb, feat), lambda i: (i, 0))

    def resident_spec(arr):
        nd = arr.ndim
        return pl.BlockSpec(arr.shape, lambda i, _n=nd: (0,) * _n)

    mlp_and_pi = (w11, b11, w12, b12, w13, b13, w14, b14,
                  w21, b21, w22, b22, w23, b23, w24, b24,
                  w_pi, b_pi)

    # ---- Stage 1: both MLPs, pi head, per-tile BN partial stats ----
    stage1 = pl.pallas_call(
        _make_stage1_kernel(tb, B, compute_dtype),
        grid=(g,),
        in_specs=[tile_spec(base_dim), tile_spec(base_dim)]
                 + [resident_spec(p) for p in mlp_and_pi],
        out_specs=(
            tile_spec(img_dim),                             # pi
            tile_spec(hid),                                 # h_beta
            pl.BlockSpec((1, 1, hid), lambda i: (i, 0, 0)),  # per-tile sum
            pl.BlockSpec((1, 1, hid), lambda i: (i, 0, 0)),  # per-tile sum of squares
        ),
        out_shape=(
            jax.ShapeDtypeStruct((b_pad, img_dim), jnp.float32),
            jax.ShapeDtypeStruct((b_pad, hid), jnp.float32),
            jax.ShapeDtypeStruct((g, 1, hid), jnp.float32),
            jax.ShapeDtypeStruct((g, 1, hid), jnp.float32),
        ),
        compiler_params=pltpu.CompilerParams(
            dimension_semantics=("parallel",)),
    )
    pi_pad, h_beta, psum, pssq = stage1(x_pi_p, x_beta_p, *mlp_and_pi)

    # Tiny cross-tile reduction of the partial stats -> full-batch statistics.
    bn_sum = jnp.sum(psum, axis=0)   # (1, 128)
    bn_ssq = jnp.sum(pssq, axis=0)   # (1, 128)

    # Fuse the beta/std heads into one (128, 2*img_dim) matmul (lane-dense output).
    w_bs = jnp.concatenate([w_beta, w_std], axis=1)
    b_bs = jnp.concatenate([b_beta, b_std], axis=1)

    # ---- Stage 2: BatchNorm (global stats) + fused beta/std heads ----
    stage2 = pl.pallas_call(
        _make_stage2_kernel(B, img_dim, compute_dtype),
        grid=(g,),
        in_specs=[
            tile_spec(hid),
            resident_spec(bn_sum),
            resident_spec(bn_ssq),
            resident_spec(bn_gamma),
            resident_spec(bn_beta),
            resident_spec(w_bs),
            resident_spec(b_bs),
        ],
        out_specs=pl.BlockSpec((tb, 2 * img_dim), lambda i: (i, 0)),
        out_shape=jax.ShapeDtypeStruct((b_pad, 2 * img_dim), jnp.float32),
        compiler_params=pltpu.CompilerParams(
            dimension_semantics=("parallel",)),
    )
    packed = stage2(h_beta, bn_sum, bn_ssq, bn_gamma, bn_beta, w_bs, b_bs)

    pi = pi_pad[:B]
    beta = packed[:B, :img_dim]
    std = packed[:B, img_dim:]
    return pi, beta, std


def init_params(key, base_dim, img_dim, weight_dtype=jnp.bfloat16):
    """Deterministic synthetic init. Weights stored as (in, out) [bf16], biases (1, out) [f32]."""
    dims_mlp = [base_dim, 32, 128, 256, 128]

    def linear_params(k, din, dout):
        kw, kb = jax.random.split(k)
        scale = 1.0 / jnp.sqrt(din)
        w = jax.random.uniform(kw, (din, dout), jnp.float32, -scale, scale)
        b = jax.random.uniform(kb, (1, dout), jnp.float32, -scale, scale)
        return w.astype(weight_dtype), b

    keys = jax.random.split(key, 11)
    ki = iter(keys)

    mlp1 = []
    for i in range(4):
        w, b = linear_params(next(ki), dims_mlp[i], dims_mlp[i + 1])
        mlp1 += [w, b]

    mlp2 = []
    for i in range(4):
        w, b = linear_params(next(ki), dims_mlp[i], dims_mlp[i + 1])
        mlp2 += [w, b]

    bn_gamma = jnp.ones((1, 128), jnp.float32)
    bn_beta = jnp.zeros((1, 128), jnp.float32)

    w_pi, b_pi = linear_params(next(ki), 128, img_dim)
    w_beta, b_beta = linear_params(next(ki), 128, img_dim)
    w_std, b_std = linear_params(next(ki), 128, img_dim)

    # TODO(synk): BatchNorm1d running_mean/running_var (momentum-tracked buffers) are
    # not modeled; only the training-mode normalization of the forward pass is computed.
    return tuple(mlp1 + mlp2 + [bn_gamma, bn_beta,
                                w_pi, b_pi, w_beta, b_beta, w_std, b_std])


if __name__ == "__main__":
    B, base_dim, img_dim = 8, 16, 64

    key = jax.random.PRNGKey(0)
    k_xpi, k_xbeta, k_params = jax.random.split(key, 3)

    x_pi = jax.random.normal(k_xpi, (B, base_dim), jnp.float32)
    x_beta = jax.random.normal(k_xbeta, (B, base_dim), jnp.float32)
    params = init_params(k_params, base_dim, img_dim)

    fwd = jax.jit(functools.partial(plain_generator_forward, block_b=512))
    pi, beta, std = fwd(x_pi, x_beta, params)
    jax.block_until_ready((pi, beta, std))

    assert pi.shape == (B, img_dim) and beta.shape == (B, img_dim) and std.shape == (B, img_dim)
    assert bool(jnp.all((pi >= 0.0) & (pi <= 1.0)))
    assert bool(jnp.all((std >= 0.0) & (std <= 3.0)))
    print("KERNEL_OK")
</pallas_src>

<mosaic_0001>
module attributes {stable_mosaic.version = 11 : i64} {
  func.func @kernel(%arg0: i32, %arg1: memref<8x16xf32, #tpu.memory_space<vmem>>, %arg2: memref<8x16xf32, #tpu.memory_space<vmem>>, %arg3: memref<16x32xbf16, #tpu.memory_space<vmem>>, %arg4: memref<1x32xf32, #tpu.memory_space<vmem>>, %arg5: memref<32x128xbf16, #tpu.memory_space<vmem>>, %arg6: memref<1x128xf32, #tpu.memory_space<vmem>>, %arg7: memref<128x256xbf16, #tpu.memory_space<vmem>>, %arg8: memref<1x256xf32, #tpu.memory_space<vmem>>, %arg9: memref<256x128xbf16, #tpu.memory_space<vmem>>, %arg10: memref<1x128xf32, #tpu.memory_space<vmem>>, %arg11: memref<16x32xbf16, #tpu.memory_space<vmem>>, %arg12: memref<1x32xf32, #tpu.memory_space<vmem>>, %arg13: memref<32x128xbf16, #tpu.memory_space<vmem>>, %arg14: memref<1x128xf32, #tpu.memory_space<vmem>>, %arg15: memref<128x256xbf16, #tpu.memory_space<vmem>>, %arg16: memref<1x256xf32, #tpu.memory_space<vmem>>, %arg17: memref<256x128xbf16, #tpu.memory_space<vmem>>, %arg18: memref<1x128xf32, #tpu.memory_space<vmem>>, %arg19: memref<128x64xbf16, #tpu.memory_space<vmem>>, %arg20: memref<1x64xf32, #tpu.memory_space<vmem>>, %arg21: memref<8x64xf32, #tpu.memory_space<vmem>>, %arg22: memref<8x128xf32, #tpu.memory_space<vmem>>, %arg23: memref<1x1x128xf32, #tpu.memory_space<vmem>>, %arg24: memref<1x1x128xf32, #tpu.memory_space<vmem>>) attributes {dimension_semantics = [#tpu.dimension_semantics<parallel>], iteration_bounds = array<i64: 1>, scalar_prefetch = 0 : i64, scratch_operands = 0 : i64, tpu.core_type = #tpu.core_type<tc>, window_params = [{transform_indices = @transform_0, window_bounds = array<i64: 8, 16>}, {transform_indices = @transform_1, window_bounds = array<i64: 8, 16>}, {pipeline_mode = #tpu.pipeline_mode<synchronous>, transform_indices = @transform_2, window_bounds = array<i64: 16, 32>}, {pipeline_mode = #tpu.pipeline_mode<synchronous>, transform_indices = @transform_3, window_bounds = array<i64: 1, 32>}, {pipeline_mode = #tpu.pipeline_mode<synchronous>, transform_indices = @transform_4, window_bounds = array<i64: 32, 128>}, {pipeline_mode = #tpu.pipeline_mode<synchronous>, transform_indices = @transform_5, window_bounds = array<i64: 1, 128>}, {pipeline_mode = #tpu.pipeline_mode<synchronous>, transform_indices = @transform_6, window_bounds = array<i64: 128, 256>}, {pipeline_mode = #tpu.pipeline_mode<synchronous>, transform_indices = @transform_7, window_bounds = array<i64: 1, 256>}, {pipeline_mode = #tpu.pipeline_mode<synchronous>, transform_indices = @transform_8, window_bounds = array<i64: 256, 128>}, {pipeline_mode = #tpu.pipeline_mode<synchronous>, transform_indices = @transform_9, window_bounds = array<i64: 1, 128>}, {pipeline_mode = #tpu.pipeline_mode<synchronous>, transform_indices = @transform_10, window_bounds = array<i64: 16, 32>}, {pipeline_mode = #tpu.pipeline_mode<synchronous>, transform_indices = @transform_11, window_bounds = array<i64: 1, 32>}, {pipeline_mode = #tpu.pipeline_mode<synchronous>, transform_indices = @transform_12, window_bounds = array<i64: 32, 128>}, {pipeline_mode = #tpu.pipeline_mode<synchronous>, transform_indices = @transform_13, window_bounds = array<i64: 1, 128>}, {pipeline_mode = #tpu.pipeline_mode<synchronous>, transform_indices = @transform_14, window_bounds = array<i64: 128, 256>}, {pipeline_mode = #tpu.pipeline_mode<synchronous>, transform_indices = @transform_15, window_bounds = array<i64: 1, 256>}, {pipeline_mode = #tpu.pipeline_mode<synchronous>, transform_indices = @transform_16, window_bounds = array<i64: 256, 128>}, {pipeline_mode = #tpu.pipeline_mode<synchronous>, transform_indices = @transform_17, window_bounds = array<i64: 1, 128>}, {pipeline_mode = #tpu.pipeline_mode<synchronous>, transform_indices = @transform_18, window_bounds = array<i64: 128, 64>}, {pipeline_mode = #tpu.pipeline_mode<synchronous>, transform_indices = @transform_19, window_bounds = array<i64: 1, 64>}, {transform_indices = @transform_20, window_bounds = array<i64: 8, 64>}, {transform_indices = @transform_21, window_bounds = array<i64: 8, 128>}, {transform_indices = @transform_22, window_bounds = array<i64: 1, 1, 128>}, {transform_indices = @transform_23, window_bounds = array<i64: 1, 1, 128>}]} {
    %c0 = arith.constant 0 : index
    %c0_0 = arith.constant 0 : index
    %0 = vector.load %arg1[%c0, %c0_0] : memref<8x16xf32, #tpu.memory_space<vmem>>, vector<8x16xf32>
    %c0_1 = arith.constant 0 : index
    %c0_2 = arith.constant 0 : index
    %1 = vector.load %arg2[%c0_1, %c0_2] : memref<8x16xf32, #tpu.memory_space<vmem>>, vector<8x16xf32>
    %2 = arith.truncf %0 : vector<8x16xf32> to vector<8x16xbf16>
    %c0_3 = arith.constant 0 : index
    %c0_4 = arith.constant 0 : index
    %3 = vector.load %arg3[%c0_3, %c0_4] : memref<16x32xbf16, #tpu.memory_space<vmem>>, vector<16x32xbf16>
    %cst = arith.constant dense<0.000000e+00> : vector<8x32xf32>
    %4 = tpu.matmul %2, %3, %cst {dimension_numbers = #tpu.dot_dimension_numbers<[1], [0], [0], [1], [0, 0, 1, 1], [], []>} : vector<8x16xbf16>, vector<16x32xbf16>, vector<8x32xf32> -> vector<8x32xf32>
    %c0_5 = arith.constant 0 : index
    %c0_6 = arith.constant 0 : index
    %5 = vector.load %arg4[%c0_5, %c0_6] : memref<1x32xf32, #tpu.memory_space<vmem>>, vector<1x32xf32>
    %6 = vector.broadcast %5 : vector<1x32xf32> to vector<8x32xf32>
    %7 = arith.addf %4, %6 : vector<8x32xf32>
    %cst_7 = arith.constant 0.000000e+00 : f32
    %8 = vector.broadcast %cst_7 : f32 to vector<8x32xf32>
    %9 = arith.cmpf ogt, %7, %8 : vector<8x32xf32>
    %cst_8 = arith.constant 0.00999999977 : f32
    %10 = vector.broadcast %cst_8 : f32 to vector<8x32xf32>
    %11 = arith.mulf %10, %7 : vector<8x32xf32>
    %12 = arith.select %9, %7, %11 : vector<8x32xi1>, vector<8x32xf32>
    %13 = arith.truncf %12 : vector<8x32xf32> to vector<8x32xbf16>
    %c0_9 = arith.constant 0 : index
    %c0_10 = arith.constant 0 : index
    %14 = vector.load %arg5[%c0_9, %c0_10] : memref<32x128xbf16, #tpu.memory_space<vmem>>, vector<32x128xbf16>
    %cst_11 = arith.constant dense<0.000000e+00> : vector<8x128xf32>
    %15 = tpu.matmul %13, %14, %cst_11 {dimension_numbers = #tpu.dot_dimension_numbers<[1], [0], [0], [1], [0, 0, 1, 1], [], []>} : vector<8x32xbf16>, vector<32x128xbf16>, vector<8x128xf32> -> vector<8x128xf32>
    %c0_12 = arith.constant 0 : index
    %c0_13 = arith.constant 0 : index
    %16 = vector.load %arg6[%c0_12, %c0_13] : memref<1x128xf32, #tpu.memory_space<vmem>>, vector<1x128xf32>
    %17 = vector.broadcast %16 : vector<1x128xf32> to vector<8x128xf32>
    %18 = arith.addf %15, %17 : vector<8x128xf32>
    %cst_14 = arith.constant 0.000000e+00 : f32
    %19 = vector.broadcast %cst_14 : f32 to vector<8x128xf32>
    %20 = arith.cmpf ogt, %18, %19 : vector<8x128xf32>
    %cst_15 = arith.constant 0.00999999977 : f32
    %21 = vector.broadcast %cst_15 : f32 to vector<8x128xf32>
    %22 = arith.mulf %21, %18 : vector<8x128xf32>
    %23 = arith.select %20, %18, %22 : vector<8x128xi1>, vector<8x128xf32>
    %24 = arith.truncf %23 : vector<8x128xf32> to vector<8x128xbf16>
    %c0_16 = arith.constant 0 : index
    %c0_17 = arith.constant 0 : index
    %25 = vector.load %arg7[%c0_16, %c0_17] : memref<128x256xbf16, #tpu.memory_space<vmem>>, vector<128x256xbf16>
    %cst_18 = arith.constant dense<0.000000e+00> : vector<8x256xf32>
    %26 = tpu.matmul %24, %25, %cst_18 {dimension_numbers = #tpu.dot_dimension_numbers<[1], [0], [0], [1], [0, 0, 1, 1], [], []>} : vector<8x128xbf16>, vector<128x256xbf16>, vector<8x256xf32> -> vector<8x256xf32>
    %c0_19 = arith.constant 0 : index
    %c0_20 = arith.constant 0 : index
    %27 = vector.load %arg8[%c0_19, %c0_20] : memref<1x256xf32, #tpu.memory_space<vmem>>, vector<1x256xf32>
    %28 = vector.broadcast %27 : vector<1x256xf32> to vector<8x256xf32>
    %29 = arith.addf %26, %28 : vector<8x256xf32>
    %cst_21 = arith.constant 0.000000e+00 : f32
    %30 = vector.broadcast %cst_21 : f32 to vector<8x256xf32>
    %31 = arith.cmpf ogt, %29, %30 : vector<8x256xf32>
    %cst_22 = arith.constant 0.00999999977 : f32
    %32 = vector.broadcast %cst_22 : f32 to vector<8x256xf32>
    %33 = arith.mulf %32, %29 : vector<8x256xf32>
    %34 = arith.select %31, %29, %33 : vector<8x256xi1>, vector<8x256xf32>
    %35 = arith.truncf %34 : vector<8x256xf32> to vector<8x256xbf16>
    %c0_23 = arith.constant 0 : index
    %c0_24 = arith.constant 0 : index
    %36 = vector.load %arg9[%c0_23, %c0_24] : memref<256x128xbf16, #tpu.memory_space<vmem>>, vector<256x128xbf16>
    %cst_25 = arith.constant dense<0.000000e+00> : vector<8x128xf32>
    %37 = tpu.matmul %35, %36, %cst_25 {dimension_numbers = #tpu.dot_dimension_numbers<[1], [0], [0], [1], [0, 0, 1, 1], [], []>} : vector<8x256xbf16>, vector<256x128xbf16>, vector<8x128xf32> -> vector<8x128xf32>
    %c0_26 = arith.constant 0 : index
    %c0_27 = arith.constant 0 : index
    %38 = vector.load %arg10[%c0_26, %c0_27] : memref<1x128xf32, #tpu.memory_space<vmem>>, vector<1x128xf32>
    %39 = vector.broadcast %38 : vector<1x128xf32> to vector<8x128xf32>
    %40 = arith.addf %37, %39 : vector<8x128xf32>
    %cst_28 = arith.constant 0.000000e+00 : f32
    %41 = vector.broadcast %cst_28 : f32 to vector<8x128xf32>
    %42 = arith.cmpf ogt, %40, %41 : vector<8x128xf32>
    %cst_29 = arith.constant 0.00999999977 : f32
    %43 = vector.broadcast %cst_29 : f32 to vector<8x128xf32>
    %44 = arith.mulf %43, %40 : vector<8x128xf32>
    %45 = arith.select %42, %40, %44 : vector<8x128xi1>, vector<8x128xf32>
    %46 = arith.truncf %45 : vector<8x128xf32> to vector<8x128xbf16>
    %c0_30 = arith.constant 0 : index
    %c0_31 = arith.constant 0 : index
    %47 = vector.load %arg19[%c0_30, %c0_31] : memref<128x64xbf16, #tpu.memory_space<vmem>>, vector<128x64xbf16>
    %cst_32 = arith.constant dense<0.000000e+00> : vector<8x64xf32>
    %48 = tpu.matmul %46, %47, %cst_32 {dimension_numbers = #tpu.dot_dimension_numbers<[1], [0], [0], [1], [0, 0, 1, 1], [], []>} : vector<8x128xbf16>, vector<128x64xbf16>, vector<8x64xf32> -> vector<8x64xf32>
    %c0_33 = arith.constant 0 : index
    %c0_34 = arith.constant 0 : index
    %49 = vector.load %arg20[%c0_33, %c0_34] : memref<1x64xf32, #tpu.memory_space<vmem>>, vector<1x64xf32>
    %50 = vector.broadcast %49 : vector<1x64xf32> to vector<8x64xf32>
    %51 = arith.addf %48, %50 : vector<8x64xf32>
    %52 = arith.negf %51 : vector<8x64xf32>
    %53 = math.exp %52 : vector<8x64xf32>
    %cst_35 = arith.constant 1.000000e+00 : f32
    %54 = vector.broadcast %cst_35 : f32 to vector<8x64xf32>
    %55 = arith.addf %54, %53 : vector<8x64xf32>
    %56 = arith.divf %54, %55 : vector<8x64xf32>
    %c0_36 = arith.constant 0 : index
    %c0_37 = arith.constant 0 : index
    %57 = vector.load %arg21[%c0_36, %c0_37] : memref<8x64xf32, #tpu.memory_space<vmem>>, vector<8x64xf32>
    tpu.vector_store %arg21[%c0_36, %c0_37], %56 {strides = array<i32>} : memref<8x64xf32, #tpu.memory_space<vmem>>, vector<8x64xf32>,
    %58 = arith.truncf %1 : vector<8x16xf32> to vector<8x16xbf16>
    %c0_38 = arith.constant 0 : index
    %c0_39 = arith.constant 0 : index
    %59 = vector.load %arg11[%c0_38, %c0_39] : memref<16x32xbf16, #tpu.memory_space<vmem>>, vector<16x32xbf16>
    %cst_40 = arith.constant dense<0.000000e+00> : vector<8x32xf32>
    %60 = tpu.matmul %58, %59, %cst_40 {dimension_numbers = #tpu.dot_dimension_numbers<[1], [0], [0], [1], [0, 0, 1, 1], [], []>} : vector<8x16xbf16>, vector<16x32xbf16>, vector<8x32xf32> -> vector<8x32xf32>
    %c0_41 = arith.constant 0 : index
    %c0_42 = arith.constant 0 : index
    %61 = vector.load %arg12[%c0_41, %c0_42] : memref<1x32xf32, #tpu.memory_space<vmem>>, vector<1x32xf32>
    %62 = vector.broadcast %61 : vector<1x32xf32> to vector<8x32xf32>
    %63 = arith.addf %60, %62 : vector<8x32xf32>
    %cst_43 = arith.constant 0.000000e+00 : f32
    %64 = vector.broadcast %cst_43 : f32 to vector<8x32xf32>
    %65 = arith.cmpf ogt, %63, %64 : vector<8x32xf32>
    %cst_44 = arith.constant 0.00999999977 : f32
    %66 = vector.broadcast %cst_44 : f32 to vector<8x32xf32>
    %67 = arith.mulf %66, %63 : vector<8x32xf32>
    %68 = arith.select %65, %63, %67 : vector<8x32xi1>, vector<8x32xf32>
    %69 = arith.truncf %68 : vector<8x32xf32> to vector<8x32xbf16>
    %c0_45 = arith.constant 0 : index
    %c0_46 = arith.constant 0 : index
    %70 = vector.load %arg13[%c0_45, %c0_46] : memref<32x128xbf16, #tpu.memory_space<vmem>>, vector<32x128xbf16>
    %cst_47 = arith.constant dense<0.000000e+00> : vector<8x128xf32>
    %71 = tpu.matmul %69, %70, %cst_47 {dimension_numbers = #tpu.dot_dimension_numbers<[1], [0], [0], [1], [0, 0, 1, 1], [], []>} : vector<8x32xbf16>, vector<32x128xbf16>, vector<8x128xf32> -> vector<8x128xf32>
    %c0_48 = arith.constant 0 : index
    %c0_49 = arith.constant 0 : index
    %72 = vector.load %arg14[%c0_48, %c0_49] : memref<1x128xf32, #tpu.memory_space<vmem>>, vector<1x128xf32>
    %73 = vector.broadcast %72 : vector<1x128xf32> to vector<8x128xf32>
    %74 = arith.addf %71, %73 : vector<8x128xf32>
    %cst_50 = arith.constant 0.000000e+00 : f32
    %75 = vector.broadcast %cst_50 : f32 to vector<8x128xf32>
    %76 = arith.cmpf ogt, %74, %75 : vector<8x128xf32>
    %cst_51 = arith.constant 0.00999999977 : f32
    %77 = vector.broadcast %cst_51 : f32 to vector<8x128xf32>
    %78 = arith.mulf %77, %74 : vector<8x128xf32>
    %79 = arith.select %76, %74, %78 : vector<8x128xi1>, vector<8x128xf32>
    %80 = arith.truncf %79 : vector<8x128xf32> to vector<8x128xbf16>
    %c0_52 = arith.constant 0 : index
    %c0_53 = arith.constant 0 : index
    %81 = vector.load %arg15[%c0_52, %c0_53] : memref<128x256xbf16, #tpu.memory_space<vmem>>, vector<128x256xbf16>
    %cst_54 = arith.constant dense<0.000000e+00> : vector<8x256xf32>
    %82 = tpu.matmul %80, %81, %cst_54 {dimension_numbers = #tpu.dot_dimension_numbers<[1], [0], [0], [1], [0, 0, 1, 1], [], []>} : vector<8x128xbf16>, vector<128x256xbf16>, vector<8x256xf32> -> vector<8x256xf32>
    %c0_55 = arith.constant 0 : index
    %c0_56 = arith.constant 0 : index
    %83 = vector.load %arg16[%c0_55, %c0_56] : memref<1x256xf32, #tpu.memory_space<vmem>>, vector<1x256xf32>
    %84 = vector.broadcast %83 : vector<1x256xf32> to vector<8x256xf32>
    %85 = arith.addf %82, %84 : vector<8x256xf32>
    %cst_57 = arith.constant 0.000000e+00 : f32
    %86 = vector.broadcast %cst_57 : f32 to vector<8x256xf32>
    %87 = arith.cmpf ogt, %85, %86 : vector<8x256xf32>
    %cst_58 = arith.constant 0.00999999977 : f32
    %88 = vector.broadcast %cst_58 : f32 to vector<8x256xf32>
    %89 = arith.mulf %88, %85 : vector<8x256xf32>
    %90 = arith.select %87, %85, %89 : vector<8x256xi1>, vector<8x256xf32>
    %91 = arith.truncf %90 : vector<8x256xf32> to vector<8x256xbf16>
    %c0_59 = arith.constant 0 : index
    %c0_60 = arith.constant 0 : index
    %92 = vector.load %arg17[%c0_59, %c0_60] : memref<256x128xbf16, #tpu.memory_space<vmem>>, vector<256x128xbf16>
    %cst_61 = arith.constant dense<0.000000e+00> : vector<8x128xf32>
    %93 = tpu.matmul %91, %92, %cst_61 {dimension_numbers = #tpu.dot_dimension_numbers<[1], [0], [0], [1], [0, 0, 1, 1], [], []>} : vector<8x256xbf16>, vector<256x128xbf16>, vector<8x128xf32> -> vector<8x128xf32>
    %c0_62 = arith.constant 0 : index
    %c0_63 = arith.constant 0 : index
    %94 = vector.load %arg18[%c0_62, %c0_63] : memref<1x128xf32, #tpu.memory_space<vmem>>, vector<1x128xf32>
    %95 = vector.broadcast %94 : vector<1x128xf32> to vector<8x128xf32>
    %96 = arith.addf %93, %95 : vector<8x128xf32>
    %cst_64 = arith.constant 0.000000e+00 : f32
    %97 = vector.broadcast %cst_64 : f32 to vector<8x128xf32>
    %98 = arith.cmpf ogt, %96, %97 : vector<8x128xf32>
    %cst_65 = arith.constant 0.00999999977 : f32
    %99 = vector.broadcast %cst_65 : f32 to vector<8x128xf32>
    %100 = arith.mulf %99, %96 : vector<8x128xf32>
    %101 = arith.select %98, %96, %100 : vector<8x128xi1>, vector<8x128xf32>
    %c0_66 = arith.constant 0 : index
    %c0_67 = arith.constant 0 : index
    %102 = vector.load %arg22[%c0_66, %c0_67] : memref<8x128xf32, #tpu.memory_space<vmem>>, vector<8x128xf32>
    tpu.vector_store %arg22[%c0_66, %c0_67], %101 {strides = array<i32>} : memref<8x128xf32, #tpu.memory_space<vmem>>, vector<8x128xf32>,
    %c8_i32 = arith.constant 8 : i32
    %103 = arith.muli %arg0, %c8_i32 : i32
    %104 = tpu.iota {dimensions = array<i32: 0>} : vector<8x128xi32>
    %105 = vector.broadcast %103 : i32 to vector<8x128xi32>
    %106 = arith.addi %105, %104 : vector<8x128xi32>
    %c8_i32_68 = arith.constant 8 : i32
    %107 = vector.broadcast %c8_i32_68 : i32 to vector<8x128xi32>
    %108 = arith.cmpi slt, %106, %107 : vector<8x128xi32>
    %109 = arith.extui %108 : vector<8x128xi1> to vector<8x128xi32>
    %110 = arith.sitofp %109 : vector<8x128xi32> to vector<8x128xf32>
    %111 = arith.mulf %101, %110 : vector<8x128xf32>
    %cst_69 = arith.constant dense<0.000000e+00> : vector<128xf32>
    %112 = vector.multi_reduction <add>, %111, %cst_69 [0] : vector<8x128xf32> to vector<128xf32>
    %113 = vector.shape_cast %112 : vector<128xf32> to vector<1x128xf32>
    %114 = vector.shape_cast %113 : vector<1x128xf32> to vector<1x1x128xf32>
    %c0_70 = arith.constant 0 : index
    %c0_71 = arith.constant 0 : index
    %c0_72 = arith.constant 0 : index
    %115 = vector.load %arg23[%c0_70, %c0_71, %c0_72] : memref<1x1x128xf32, #tpu.memory_space<vmem>>, vector<1x1x128xf32>
    tpu.vector_store %arg23[%c0_70, %c0_71, %c0_72], %114 {strides = array<i32>} : memref<1x1x128xf32, #tpu.memory_space<vmem>>, vector<1x1x128xf32>,
    %116 = arith.mulf %111, %101 : vector<8x128xf32>
    %cst_73 = arith.constant dense<0.000000e+00> : vector<128xf32>
    %117 = vector.multi_reduction <add>, %116, %cst_73 [0] : vector<8x128xf32> to vector<128xf32>
    %118 = vector.shape_cast %117 : vector<128xf32> to vector<1x128xf32>
    %119 = vector.shape_cast %118 : vector<1x128xf32> to vector<1x1x128xf32>
    %c0_74 = arith.constant 0 : index
    %c0_75 = arith.constant 0 : index
    %c0_76 = arith.constant 0 : index
    %120 = vector.load %arg24[%c0_74, %c0_75, %c0_76] : memref<1x1x128xf32, #tpu.memory_space<vmem>>, vector<1x1x128xf32>
    tpu.vector_store %arg24[%c0_74, %c0_75, %c0_76], %119 {strides = array<i32>} : memref<1x1x128xf32, #tpu.memory_space<vmem>>, vector<1x1x128xf32>,
    return
  }
  func.func @transform_0(%arg0: i32) -> (i32, i32) {
    %c0_i32 = arith.constant 0 : i32
    %c0_i32_0 = arith.constant 0 : i32
    return %arg0, %c0_i32 : i32, i32
  }
  func.func @transform_1(%arg0: i32) -> (i32, i32) {
    %c0_i32 = arith.constant 0 : i32
    %c0_i32_0 = arith.constant 0 : i32
    return %arg0, %c0_i32 : i32, i32
  }
  func.func @transform_2(%arg0: i32) -> (i32, i32) {
    %c0_i32 = arith.constant 0 : i32
    %c0_i32_0 = arith.constant 0 : i32
    %c0_i32_1 = arith.constant 0 : i32
    return %c0_i32, %c0_i32_0 : i32, i32
  }
  func.func @transform_3(%arg0: i32) -> (i32, i32) {
    %c0_i32 = arith.constant 0 : i32
    %c0_i32_0 = arith.constant 0 : i32
    %c0_i32_1 = arith.constant 0 : i32
    return %c0_i32, %c0_i32_0 : i32, i32
  }
  func.func @transform_4(%arg0: i32) -> (i32, i32) {
    %c0_i32 = arith.constant 0 : i32
    %c0_i32_0 = arith.constant 0 : i32
    %c0_i32_1 = arith.constant 0 : i32
    return %c0_i32, %c0_i32_0 : i32, i32
  }
  func.func @transform_5(%arg0: i32) -> (i32, i32) {
    %c0_i32 = arith.constant 0 : i32
    %c0_i32_0 = arith.constant 0 : i32
    %c0_i32_1 = arith.constant 0 : i32
    return %c0_i32, %c0_i32_0 : i32, i32
  }
  func.func @transform_6(%arg0: i32) -> (i32, i32) {
    %c0_i32 = arith.constant 0 : i32
    %c0_i32_0 = arith.constant 0 : i32
    %c0_i32_1 = arith.constant 0 : i32
    return %c0_i32, %c0_i32_0 : i32, i32
  }
  func.func @transform_7(%arg0: i32) -> (i32, i32) {
    %c0_i32 = arith.constant 0 : i32
    %c0_i32_0 = arith.constant 0 : i32
    %c0_i32_1 = arith.constant 0 : i32
    return %c0_i32, %c0_i32_0 : i32, i32
  }
  func.func @transform_8(%arg0: i32) -> (i32, i32) {
    %c0_i32 = arith.constant 0 : i32
    %c0_i32_0 = arith.constant 0 : i32
    %c0_i32_1 = arith.constant 0 : i32
    return %c0_i32, %c0_i32_0 : i32, i32
  }
  func.func @transform_9(%arg0: i32) -> (i32, i32) {
    %c0_i32 = arith.constant 0 : i32
    %c0_i32_0 = arith.constant 0 : i32
    %c0_i32_1 = arith.constant 0 : i32
    return %c0_i32, %c0_i32_0 : i32, i32
  }
  func.func @transform_10(%arg0: i32) -> (i32, i32) {
    %c0_i32 = arith.constant 0 : i32
    %c0_i32_0 = arith.constant 0 : i32
    %c0_i32_1 = arith.constant 0 : i32
    return %c0_i32, %c0_i32_0 : i32, i32
  }
  func.func @transform_11(%arg0: i32) -> (i32, i32) {
    %c0_i32 = arith.constant 0 : i32
    %c0_i32_0 = arith.constant 0 : i32
    %c0_i32_1 = arith.constant 0 : i32
    return %c0_i32, %c0_i32_0 : i32, i32
  }
  func.func @transform_12(%arg0: i32) -> (i32, i32) {
    %c0_i32 = arith.constant 0 : i32
    %c0_i32_0 = arith.constant 0 : i32
    %c0_i32_1 = arith.constant 0 : i32
    return %c0_i32, %c0_i32_0 : i32, i32
  }
  func.func @transform_13(%arg0: i32) -> (i32, i32) {
    %c0_i32 = arith.constant 0 : i32
    %c0_i32_0 = arith.constant 0 : i32
    %c0_i32_1 = arith.constant 0 : i32
    return %c0_i32, %c0_i32_0 : i32, i32
  }
  func.func @transform_14(%arg0: i32) -> (i32, i32) {
    %c0_i32 = arith.constant 0 : i32
    %c0_i32_0 = arith.constant 0 : i32
    %c0_i32_1 = arith.constant 0 : i32
    return %c0_i32, %c0_i32_0 : i32, i32
  }
  func.func @transform_15(%arg0: i32) -> (i32, i32) {
    %c0_i32 = arith.constant 0 : i32
    %c0_i32_0 = arith.constant 0 : i32
    %c0_i32_1 = arith.constant 0 : i32
    return %c0_i32, %c0_i32_0 : i32, i32
  }
  func.func @transform_16(%arg0: i32) -> (i32, i32) {
    %c0_i32 = arith.constant 0 : i32
    %c0_i32_0 = arith.constant 0 : i32
    %c0_i32_1 = arith.constant 0 : i32
    return %c0_i32, %c0_i32_0 : i32, i32
  }
  func.func @transform_17(%arg0: i32) -> (i32, i32) {
    %c0_i32 = arith.constant 0 : i32
    %c0_i32_0 = arith.constant 0 : i32
    %c0_i32_1 = arith.constant 0 : i32
    return %c0_i32, %c0_i32_0 : i32, i32
  }
  func.func @transform_18(%arg0: i32) -> (i32, i32) {
    %c0_i32 = arith.constant 0 : i32
    %c0_i32_0 = arith.constant 0 : i32
    %c0_i32_1 = arith.constant 0 : i32
    return %c0_i32, %c0_i32_0 : i32, i32
  }
  func.func @transform_19(%arg0: i32) -> (i32, i32) {
    %c0_i32 = arith.constant 0 : i32
    %c0_i32_0 = arith.constant 0 : i32
    %c0_i32_1 = arith.constant 0 : i32
    return %c0_i32, %c0_i32_0 : i32, i32
  }
  func.func @transform_20(%arg0: i32) -> (i32, i32) {
    %c0_i32 = arith.constant 0 : i32
    %c0_i32_0 = arith.constant 0 : i32
    return %arg0, %c0_i32 : i32, i32
  }
  func.func @transform_21(%arg0: i32) -> (i32, i32) {
    %c0_i32 = arith.constant 0 : i32
    %c0_i32_0 = arith.constant 0 : i32
    return %arg0, %c0_i32 : i32, i32
  }
  func.func @transform_22(%arg0: i32) -> (i32, i32, i32) {
    %c0_i32 = arith.constant 0 : i32
    %c0_i32_0 = arith.constant 0 : i32
    %c0_i32_1 = arith.constant 0 : i32
    return %arg0, %c0_i32, %c0_i32_0 : i32, i32, i32
  }
  func.func @transform_23(%arg0: i32) -> (i32, i32, i32) {
    %c0_i32 = arith.constant 0 : i32
    %c0_i32_0 = arith.constant 0 : i32
    %c0_i32_1 = arith.constant 0 : i32
    return %arg0, %c0_i32, %c0_i32_0 : i32, i32, i32
  }
}

module attributes {stable_mosaic.version = 11 : i64} {
  func.func @kernel(%arg0: i32, %arg1: memref<8x128xf32, #tpu.memory_space<vmem>>, %arg2: memref<1x128xf32, #tpu.memory_space<vmem>>, %arg3: memref<1x128xf32, #tpu.memory_space<vmem>>, %arg4: memref<1x128xf32, #tpu.memory_space<vmem>>, %arg5: memref<1x128xf32, #tpu.memory_space<vmem>>, %arg6: memref<128x128xbf16, #tpu.memory_space<vmem>>, %arg7: memref<1x128xf32, #tpu.memory_space<vmem>>, %arg8: memref<8x128xf32, #tpu.memory_space<vmem>>) attributes {dimension_semantics = [#tpu.dimension_semantics<parallel>], iteration_bounds = array<i64: 1>, scalar_prefetch = 0 : i64, scratch_operands = 0 : i64, tpu.core_type = #tpu.core_type<tc>, window_params = [{transform_indices = @transform_0, window_bounds = array<i64: 8, 128>}, {pipeline_mode = #tpu.pipeline_mode<synchronous>, transform_indices = @transform_1, window_bounds = array<i64: 1, 128>}, {pipeline_mode = #tpu.pipeline_mode<synchronous>, transform_indices = @transform_2, window_bounds = array<i64: 1, 128>}, {pipeline_mode = #tpu.pipeline_mode<synchronous>, transform_indices = @transform_3, window_bounds = array<i64: 1, 128>}, {pipeline_mode = #tpu.pipeline_mode<synchronous>, transform_indices = @transform_4, window_bounds = array<i64: 1, 128>}, {pipeline_mode = #tpu.pipeline_mode<synchronous>, transform_indices = @transform_5, window_bounds = array<i64: 128, 128>}, {pipeline_mode = #tpu.pipeline_mode<synchronous>, transform_indices = @transform_6, window_bounds = array<i64: 1, 128>}, {transform_indices = @transform_7, window_bounds = array<i64: 8, 128>}]} {
    %c0 = arith.constant 0 : index
    %c0_0 = arith.constant 0 : index
    %0 = vector.load %arg1[%c0, %c0_0] : memref<8x128xf32, #tpu.memory_space<vmem>>, vector<8x128xf32>
    %c0_1 = arith.constant 0 : index
    %c0_2 = arith.constant 0 : index
    %1 = vector.load %arg2[%c0_1, %c0_2] : memref<1x128xf32, #tpu.memory_space<vmem>>, vector<1x128xf32>
    %cst = arith.constant 1.250000e-01 : f32
    %2 = vector.broadcast %cst : f32 to vector<1x128xf32>
    %3 = arith.mulf %1, %2 : vector<1x128xf32>
    %c0_3 = arith.constant 0 : index
    %c0_4 = arith.constant 0 : index
    %4 = vector.load %arg3[%c0_3, %c0_4] : memref<1x128xf32, #tpu.memory_space<vmem>>, vector<1x128xf32>
    %cst_5 = arith.constant 1.250000e-01 : f32
    %5 = vector.broadcast %cst_5 : f32 to vector<1x128xf32>
    %6 = arith.mulf %4, %5 : vector<1x128xf32>
    %7 = arith.mulf %3, %3 : vector<1x128xf32>
    %8 = arith.subf %6, %7 : vector<1x128xf32>
    %cst_6 = arith.constant 0.000000e+00 : f32
    %9 = vector.broadcast %cst_6 : f32 to vector<1x128xf32>
    %10 = arith.maximumf %8, %9 : vector<1x128xf32>
    %cst_7 = arith.constant 9.99999974E-6 : f32
    %11 = vector.broadcast %cst_7 : f32 to vector<1x128xf32>
    %12 = arith.addf %10, %11 : vector<1x128xf32>
    %13 = math.rsqrt %12 : vector<1x128xf32>
    %c0_8 = arith.constant 0 : index
    %c0_9 = arith.constant 0 : index
    %14 = vector.load %arg4[%c0_8, %c0_9] : memref<1x128xf32, #tpu.memory_space<vmem>>, vector<1x128xf32>
    %15 = arith.mulf %14, %13 : vector<1x128xf32>
    %c0_10 = arith.constant 0 : index
    %c0_11 = arith.constant 0 : index
    %16 = vector.load %arg5[%c0_10, %c0_11] : memref<1x128xf32, #tpu.memory_space<vmem>>, vector<1x128xf32>
    %17 = arith.mulf %3, %15 : vector<1x128xf32>
    %18 = arith.subf %16, %17 : vector<1x128xf32>
    %19 = vector.broadcast %15 : vector<1x128xf32> to vector<8x128xf32>
    %20 = arith.mulf %0, %19 : vector<8x128xf32>
    %21 = vector.broadcast %18 : vector<1x128xf32> to vector<8x128xf32>
    %22 = arith.addf %20, %21 : vector<8x128xf32>
    %23 = arith.truncf %22 : vector<8x128xf32> to vector<8x128xbf16>
    %c0_12 = arith.constant 0 : index
    %c0_13 = arith.constant 0 : index
    %24 = vector.load %arg6[%c0_12, %c0_13] : memref<128x128xbf16, #tpu.memory_space<vmem>>, vector<128x128xbf16>
    %cst_14 = arith.constant dense<0.000000e+00> : vector<8x128xf32>
    %25 = tpu.matmul %23, %24, %cst_14 {dimension_numbers = #tpu.dot_dimension_numbers<[1], [0], [0], [1], [0, 0, 1, 1], [], []>} : vector<8x128xbf16>, vector<128x128xbf16>, vector<8x128xf32> -> vector<8x128xf32>
    %c0_15 = arith.constant 0 : index
    %c0_16 = arith.constant 0 : index
    %26 = vector.load %arg7[%c0_15, %c0_16] : memref<1x128xf32, #tpu.memory_space<vmem>>, vector<1x128xf32>
    %27 = vector.broadcast %26 : vector<1x128xf32> to vector<8x128xf32>
    %28 = arith.addf %25, %27 : vector<8x128xf32>
    %29 = tpu.iota {dimensions = array<i32: 1>} : vector<8x128xi32>
    %c64_i32 = arith.constant 64 : i32
    %30 = vector.broadcast %c64_i32 : i32 to vector<8x128xi32>
    %31 = arith.cmpi slt, %29, %30 : vector<8x128xi32>
    %32 = arith.negf %28 : vector<8x128xf32>
    %33 = math.exp %32 : vector<8x128xf32>
    %cst_17 = arith.constant 1.000000e+00 : f32
    %34 = vector.broadcast %cst_17 : f32 to vector<8x128xf32>
    %35 = arith.addf %34, %33 : vector<8x128xf32>
    %36 = arith.divf %34, %35 : vector<8x128xf32>
    %cst_18 = arith.constant 3.000000e+00 : f32
    %37 = vector.broadcast %cst_18 : f32 to vector<8x128xf32>
    %38 = arith.mulf %37, %36 : vector<8x128xf32>
    %39 = arith.select %31, %28, %38 : vector<8x128xi1>, vector<8x128xf32>
    %c0_19 = arith.constant 0 : index
    %c0_20 = arith.constant 0 : index
    %40 = vector.load %arg8[%c0_19, %c0_20] : memref<8x128xf32, #tpu.memory_space<vmem>>, vector<8x128xf32>
    tpu.vector_store %arg8[%c0_19, %c0_20], %39 {strides = array<i32>} : memref<8x128xf32, #tpu.memory_space<vmem>>, vector<8x128xf32>,
    return
  }
  func.func @transform_0(%arg0: i32) -> (i32, i32) {
    %c0_i32 = arith.constant 0 : i32
    %c0_i32_0 = arith.constant 0 : i32
    return %arg0, %c0_i32 : i32, i32
  }
  func.func @transform_1(%arg0: i32) -> (i32, i32) {
    %c0_i32 = arith.constant 0 : i32
    %c0_i32_0 = arith.constant 0 : i32
    %c0_i32_1 = arith.constant 0 : i32
    return %c0_i32, %c0_i32_0 : i32, i32
  }
  func.func @transform_2(%arg0: i32) -> (i32, i32) {
    %c0_i32 = arith.constant 0 : i32
    %c0_i32_0 = arith.constant 0 : i32
    %c0_i32_1 = arith.constant 0 : i32
    return %c0_i32, %c0_i32_0 : i32, i32
  }
  func.func @transform_3(%arg0: i32) -> (i32, i32) {
    %c0_i32 = arith.constant 0 : i32
    %c0_i32_0 = arith.constant 0 : i32
    %c0_i32_1 = arith.constant 0 : i32
    return %c0_i32, %c0_i32_0 : i32, i32
  }
  func.func @transform_4(%arg0: i32) -> (i32, i32) {
    %c0_i32 = arith.constant 0 : i32
    %c0_i32_0 = arith.constant 0 : i32
    %c0_i32_1 = arith.constant 0 : i32
    return %c0_i32, %c0_i32_0 : i32, i32
  }
  func.func @transform_5(%arg0: i32) -> (i32, i32) {
    %c0_i32 = arith.constant 0 : i32
    %c0_i32_0 = arith.constant 0 : i32
    %c0_i32_1 = arith.constant 0 : i32
    return %c0_i32, %c0_i32_0 : i32, i32
  }
  func.func @transform_6(%arg0: i32) -> (i32, i32) {
    %c0_i32 = arith.constant 0 : i32
    %c0_i32_0 = arith.constant 0 : i32
    %c0_i32_1 = arith.constant 0 : i32
    return %c0_i32, %c0_i32_0 : i32, i32
  }
  func.func @transform_7(%arg0: i32) -> (i32, i32) {
    %c0_i32 = arith.constant 0 : i32
    %c0_i32_0 = arith.constant 0 : i32
    return %arg0, %c0_i32 : i32, i32
  }
}

</mosaic_0001>

<llo_original>
// kernel: plain_generator_forward.3
$region0: #{plain_generator_forward.3}
  #allocation0 [shape = 'u32[]', space=smem, size = 0x4, offset = 0x4, fixed_abs, tag = 'smem constant byte address 0x4 - core index']
  #allocation1 [shape = 'u32[72,128]{1,0:T(1,128)}', space=vmem, size = 0x9000, scoped, tag = 'internal scratch']
  %s0 = inlined_call_operand.vmem [shape: f32[8,128], index: 0, kind: input, shape index: {}]
  %s1 = inlined_call_operand.vmem [shape: f32[1,128], index: 1, kind: input, shape index: {}]
  %s2 = inlined_call_operand.vmem [shape: f32[1,128], index: 2, kind: input, shape index: {}]
  %s3 = inlined_call_operand.vmem [shape: f32[1,128], index: 3, kind: input, shape index: {}]
  %s4 = inlined_call_operand.vmem [shape: f32[1,128], index: 4, kind: input, shape index: {}]
  %s5 = inlined_call_operand.vmem [shape: bf16[128,128], index: 5, kind: input, shape index: {}]
  %s6 = inlined_call_operand.vmem [shape: f32[1,128], index: 6, kind: input, shape index: {}]
  %s7 = inlined_call_operand.vmem [shape: f32[8,128], index: 7, kind: output, shape index: {}]
  %s8 = sld [smem:[#allocation0]]
  $region38: #{plain_generator_forward.3} parent=0
    _
  %s10 = ssub.s32 1, %s8
  %s11 = scalar_select 0, %s10, %s8
  // Predicated region
  $region2: #{plain_generator_forward.3} parent=0 // pred_check
    _
  $region3: #{plain_generator_forward.3} parent=0 // pred_check_branch
    %13 = sbr.rel (0) target = $region5
  $region4: #{plain_generator_forward.3} parent=0 // pred_region
    _
  $region5: #{plain_generator_forward.3} parent=0 // pred_fallthru
    _
  // Predicated region
  $region6: #{plain_generator_forward.3} parent=0 // pred_check
    _
  $region7: #{plain_generator_forward.3} parent=0 // pred_check_branch
    %15 = sbr.rel (0) target = $region9
  $region8: #{plain_generator_forward.3} parent=0 // pred_region
    _
  $region9: #{plain_generator_forward.3} parent=0 // pred_fallthru
    _
  // Predicated region
  $region10: #{plain_generator_forward.3} parent=0 // pred_check
    _
  $region11: #{plain_generator_forward.3} parent=0 // pred_check_branch
    %17 = sbr.rel (0) target = $region13
  $region12: #{plain_generator_forward.3} parent=0 // pred_region
    _
  $region13: #{plain_generator_forward.3} parent=0 // pred_fallthru
    _
  // Predicated region
  $region14: #{plain_generator_forward.3} parent=0 // pred_check
    _
  $region15: #{plain_generator_forward.3} parent=0 // pred_check_branch
    %19 = sbr.rel (0) target = $region17
  $region16: #{plain_generator_forward.3} parent=0 // pred_region
    _
  $region17: #{plain_generator_forward.3} parent=0 // pred_fallthru
    _
  // Predicated region
  $region18: #{plain_generator_forward.3} parent=0 // pred_check
    _
  $region19: #{plain_generator_forward.3} parent=0 // pred_check_branch
    %21 = sbr.rel (0) target = $region21
  $region20: #{plain_generator_forward.3} parent=0 // pred_region
    _
  $region21: #{plain_generator_forward.3} parent=0 // pred_fallthru
    _
  // Predicated region
  $region22: #{plain_generator_forward.3} parent=0 // pred_check
    _
  $region23: #{plain_generator_forward.3} parent=0 // pred_check_branch
    %23 = sbr.rel (0) target = $region25
  $region24: #{plain_generator_forward.3} parent=0 // pred_region
    _
  $region25: #{plain_generator_forward.3} parent=0 // pred_fallthru
    _
  // Predicated region
  $region26: #{plain_generator_forward.3} parent=0 // pred_check
    _
  $region27: #{plain_generator_forward.3} parent=0 // pred_check_branch
    %25 = sbr.rel (0) target = $region29
  $region28: #{plain_generator_forward.3} parent=0 // pred_region
    _
  $region29: #{plain_generator_forward.3} parent=0 // pred_fallthru
    _
  %v26 = vld [vmem:[%s0] sm:$0xff]
  %v27 = vld [vmem:[%s1] sm:$0x1]
  %v28 = vmul.f32 %v27, 0.125
  %v29 = vld [vmem:[%s2] sm:$0x1]
  %v30 = vmul.f32 %v29, 0.125
  %v31 = vmul.f32 %v28, %v28
  %v32 = vsub.f32 %v30, %v31
  %v33 = vmax.f32 %v32, 0.0
  %v34 = vadd.f32 %v33, 1e-05
  %v35 = vrsqrt.pop %v34
  %v36 = vmul.f32 %v35, %v34
  %v37 = vmul.f32 %v36, %v35
  %v38 = vmul.f32 0.5, %v37
  %v39 = vsub.f32 1.5, %v38
  %v40 = vmul.f32 %v35, %v39
  %vm41 = vweird.f32 %v34
  %vm42 = vweird.f32 %v35
  %vm43 = vmor %vm41, %vm42
  %v44 = vsel %vm43, %v35, %v40
  %v45 = vld [vmem:[%s3] sm:$0x1]
  %v46 = vmul.f32 %v45, %v44
  %v47 = vld [vmem:[%s4] sm:$0x1]
  %v48 = vmul.f32 %v28, %v46
  %v49 = vsub.f32 %v47, %v48
  %v51 = vperm.slane %v46, 0
  %v53 = vmul.f32 %v26, %v51
  %v55 = vperm.slane %v49, 0
  %v57 = vadd.f32 %v53, %v55
  %v58 = vpack.c.bf16 %v57, %v57
  %v59 = vld [vmem:[%s5] sm:$0xf]
  %v60 = vld [vmem:[%s5 + $0x4] sm:$0xf]
  %v61 = vld [vmem:[%s5 + $0x8] sm:$0xf]
  %v62 = vld [vmem:[%s5 + $0xc] sm:$0xf]
  %v63 = vld [vmem:[%s5 + $0x10] sm:$0xf]
  %v64 = vld [vmem:[%s5 + $0x14] sm:$0xf]
  %v65 = vld [vmem:[%s5 + $0x18] sm:$0xf]
  %v66 = vld [vmem:[%s5 + $0x1c] sm:$0xf]
  %v67 = vld [vmem:[%s5 + $0x20] sm:$0xf]
  %v68 = vld [vmem:[%s5 + $0x24] sm:$0xf]
  %v69 = vld [vmem:[%s5 + $0x28] sm:$0xf]
  %v70 = vld [vmem:[%s5 + $0x2c] sm:$0xf]
  %v71 = vld [vmem:[%s5 + $0x30] sm:$0xf]
  %v72 = vld [vmem:[%s5 + $0x34] sm:$0xf]
  %v73 = vld [vmem:[%s5 + $0x38] sm:$0xf]
  %v74 = vld [vmem:[%s5 + $0x3c] sm:$0xf]
  %v75 = vld [vmem:[%s6] sm:$0x1]
  %v77 = vperm.slane %v75, 0
  %v95 = vunpack.c.l.b16 %v59
  %v96 = vunpack.c.l.b16 %v60
  %v97 = vunpack.c.l.b16 %v61
  %v98 = vunpack.c.l.b16 %v62
  %v99 = vunpack.c.l.b16 %v63
  %v100 = vunpack.c.l.b16 %v64
  %v101 = vunpack.c.l.b16 %v65
  %v102 = vunpack.c.l.b16 %v66
  %v103 = vunpack.c.l.b16 %v67
  %v104 = vunpack.c.l.b16 %v68
  %v105 = vunpack.c.l.b16 %v69
  %v106 = vunpack.c.l.b16 %v70
  %v107 = vunpack.c.l.b16 %v71
  %v108 = vunpack.c.l.b16 %v72
  %v109 = vunpack.c.l.b16 %v73
  %v110 = vunpack.c.l.b16 %v74
  %v111 = vpack.c.b16 %v96, %v95
  %v112 = vpack.c.b16 %v98, %v97
  %v113 = vpack.c.b16 %v100, %v99
  %v114 = vpack.c.b16 %v102, %v101
  %v115 = vpack.c.b16 %v104, %v103
  %v116 = vpack.c.b16 %v106, %v105
  %v117 = vpack.c.b16 %v108, %v107
  %v118 = vpack.c.b16 %v110, %v109
  %127 = vmatpush.bf16.msra.mxu0 %v118
  %128 = vmatpush.bf16.msra.mxu0 %v117
  %129 = vmatpush.bf16.msra.mxu0 %v116
  %130 = vmatpush.bf16.msra.mxu0 %v115
  %131 = vmatpush.bf16.msra.mxu0 %v114
  %132 = vmatpush.bf16.msra.mxu0 %v113
  %133 = vmatpush.bf16.msra.mxu0 %v112
  %134 = vmatpush.bf16.msra.mxu0 %v111
  %135 = vmatmul.bf16.gmra.mxu0 %v58
  %v136 = vpop.f32.mrf.mxu0
  %v137 = vadd.f32 %v77, %v136
  %v138 = vpop.f32.mrf.mxu0
  %139 = vdwg.mxu0
  %v140 = vlaneseq
  %v141 = vand.u32 %v140, 127
  %vm142 = vcmp.lt.s32.totalorder %v141, 64
  %v143 = vxor.u32 %v137, 2147483648
  %v144 = vmul.f32 %v143, 1.442695
  %v145 = vpow.pop %v144
  %v146 = vadd.f32 %v145, 1.0
  %v147 = vrcp.pop %v146
  %v148 = vmul.f32 %v146, %v147
  %v149 = vsub.f32 1.0, %v148
  %v150 = vmul.f32 %v147, %v149
  %v151 = vadd.f32 %v147, %v150
  %vm152 = vweird.f32 %v146
  %vm153 = vweird.f32 %v147
  %vm154 = vmor %vm152, %vm153
  %v155 = vsel %vm154, %v147, %v151
  %v156 = vand.u32 2147483647, %v146
  %vm157 = vcmp.eq.f32.partialorder %v156, 8.507059e+37
  %v158 = vand.u32 %v146, 2147483648
  %v159 = vor.u32 1.1754944e-38, %v158
  %v160 = vsel %vm157, %v159, %v155
  %v161 = vmul.f32 1.0, %v160
  %v162 = vmul.f32 %v161, 3.0
  %v163 = vsel %vm142, %v137, %v162
  %164 = vst [vmem:[%s7] sm:$0xff] %v163
  // Predicated region
  $region30: #{plain_generator_forward.3} parent=0 // pred_check
    _
  $region31: #{plain_generator_forward.3} parent=0 // pred_check_branch
    %166 = sbr.rel (0) target = $region33
  $region32: #{plain_generator_forward.3} parent=0 // pred_region
    _
  $region33: #{plain_generator_forward.3} parent=0 // pred_fallthru
    _
  // Predicated region
  $region34: #{plain_generator_forward.3} parent=0 // pred_check
    _
  $region35: #{plain_generator_forward.3} parent=0 // pred_check_branch
    %168 = sbr.rel (0) target = $region37
  $region36: #{plain_generator_forward.3} parent=0 // pred_region
    _
  $region37: #{plain_generator_forward.3} parent=0 // pred_fallthru
    _

// kernel: plain_generator_forward.2
$region0: #{plain_generator_forward.2}
  #allocation0 [shape = 'u32[]', space=smem, size = 0x4, offset = 0x4, fixed_abs, tag = 'smem constant byte address 0x4 - core index']
  #allocation1 [shape = 'u32[72,128]{1,0:T(1,128)}', space=vmem, size = 0x9000, scoped, tag = 'internal scratch']
  %s0 = inlined_call_operand.vmem [shape: f32[8,16], index: 0, kind: input, shape index: {}]
  %s1 = inlined_call_operand.vmem [shape: f32[8,16], index: 1, kind: input, shape index: {}]
  %s2 = inlined_call_operand.vmem [shape: bf16[16,32], index: 2, kind: input, shape index: {}]
  %s3 = inlined_call_operand.vmem [shape: f32[1,32], index: 3, kind: input, shape index: {}]
  %s4 = inlined_call_operand.vmem [shape: bf16[32,128], index: 4, kind: input, shape index: {}]
  %s5 = inlined_call_operand.vmem [shape: f32[1,128], index: 5, kind: input, shape index: {}]
  %s6 = inlined_call_operand.hbm [shape: bf16[128,256], index: 6, kind: input, shape index: {}]
  %s7 = inlined_call_operand.vmem [shape: f32[1,256], index: 7, kind: input, shape index: {}]
  %s8 = inlined_call_operand.hbm [shape: bf16[256,128], index: 8, kind: input, shape index: {}]
  %s9 = inlined_call_operand.vmem [shape: f32[1,128], index: 9, kind: input, shape index: {}]
  %s10 = inlined_call_operand.vmem [shape: bf16[16,32], index: 10, kind: input, shape index: {}]
  %s11 = inlined_call_operand.vmem [shape: f32[1,32], index: 11, kind: input, shape index: {}]
  %s12 = inlined_call_operand.vmem [shape: bf16[32,128], index: 12, kind: input, shape index: {}]
  %s13 = inlined_call_operand.vmem [shape: f32[1,128], index: 13, kind: input, shape index: {}]
  %s14 = inlined_call_operand.hbm [shape: bf16[128,256], index: 14, kind: input, shape index: {}]
  %s15 = inlined_call_operand.vmem [shape: f32[1,256], index: 15, kind: input, shape index: {}]
  %s16 = inlined_call_operand.hbm [shape: bf16[256,128], index: 16, kind: input, shape index: {}]
  %s17 = inlined_call_operand.hbm [shape: f32[1,128], index: 17, kind: input, shape index: {}]
  %s18 = inlined_call_operand.vmem [shape: bf16[128,64], index: 18, kind: input, shape index: {}]
  %s19 = inlined_call_operand.hbm [shape: f32[1,64], index: 19, kind: input, shape index: {}]
  %s20 = inlined_call_operand.hbm [shape: f32[8,64], index: 20, kind: output, shape index: {0}]
  %s21 = inlined_call_operand.vmem [shape: f32[8,128], index: 21, kind: output, shape index: {1}]
  %s22 = inlined_call_operand.vmem [shape: f32[1,1,128], index: 22, kind: output, shape index: {2}]
  %s23 = inlined_call_operand.vmem [shape: f32[1,1,128], index: 23, kind: output, shape index: {3}]
  %24 = xla_tuple %s20, %s21, %s22, %s23
  %s25 = sld [smem:[#allocation0]]
  $region138: #{plain_generator_forward.2} parent=0
    _
  %s27 = ssub.s32 1, %s25
  %s28 = scalar_select 0, %s27, %s25
  $region1: #{plain_generator_forward.2} parent=0
    #allocation2 [shape = 'u8[65536]{0}', space=vmem, size = 0x10000, scoped, tag = 'input window, operand 6, single buffered']
    #allocation3 [shape = 's32[1]{0}', space=sflag, size = 0x4, scoped, tag = 'scoped memory for plain_generator_forward.2']
    #allocation4 [shape = 's32[1]{0}', space=sflag, size = 0x4, scoped, tag = 'scoped memory for plain_generator_forward.2']
    #allocation5 [shape = 'u8[65536]{0}', space=vmem, size = 0x10000, scoped, tag = 'input window, operand 8, single buffered']
    #allocation6 [shape = 's32[1]{0}', space=sflag, size = 0x4, scoped, tag = 'scoped memory for plain_generator_forward.2']
    #allocation7 [shape = 'u8[65536]{0}', space=vmem, size = 0x10000, scoped, tag = 'input window, operand 14, single buffered']
    #allocation8 [shape = 'u8[65536]{0}', space=vmem, size = 0x10000, scoped, tag = 'input window, operand 16, single buffered']
    #allocation9 [shape = 's32[1]{0}', space=sflag, size = 0x4, scoped, tag = 'scoped memory for plain_generator_forward.2']
    #allocation10 [shape = 'u8[512]{0}', space=vmem, size = 0x400, scoped, tag = 'input window, operand 17, single buffered']
    #allocation11 [shape = 'u8[512]{0}', space=vmem, size = 0x400, scoped, tag = 'input window, operand 19, single buffered']
    #allocation12 [shape = 's32[1]{0}', space=sflag, size = 0x4, scoped, tag = 'scoped memory for plain_generator_forward.2']
    #allocation13 [shape = 'u8[4096]{0}', space=vmem, size = 0x1000, scoped, tag = 'output window, operand 0, single buffered']
    %29 = vsyncpa [#allocation3], 0
    %30 = vsyncpa [#allocation6], 0
    %31 = vsyncpa [#allocation9], 0
    %32 = vsyncpa [#allocation12], 0
    %33 = vsyncpa [#allocation4], 0
    // Predicated region
    $region2: #{plain_generator_forward.2} parent=1 // pred_check
      _
    $region3: #{plain_generator_forward.2} parent=1 // pred_check_branch
      %35 = sbr.rel (0) target = $region5
    $region4: #{plain_generator_forward.2} parent=1 // pred_region
      _
    $region5: #{plain_generator_forward.2} parent=1 // pred_fallthru
      _
    // Predicated region
    $region6: #{plain_generator_forward.2} parent=1 // pred_check
      _
    $region7: #{plain_generator_forward.2} parent=1 // pred_check_branch
      %37 = sbr.rel (0) target = $region9
    $region8: #{plain_generator_forward.2} parent=1 // pred_region
      _
    $region9: #{plain_generator_forward.2} parent=1 // pred_fallthru
      _
    // Predicated region
    $region10: #{plain_generator_forward.2} parent=1 // pred_check
      _
    $region11: #{plain_generator_forward.2} parent=1 // pred_check_branch
      %39 = sbr.rel (0) target = $region13
    $region12: #{plain_generator_forward.2} parent=1 // pred_region
      _
    $region13: #{plain_generator_forward.2} parent=1 // pred_fallthru
      _
    // Predicated region
    $region14: #{plain_generator_forward.2} parent=1 // pred_check
      _
    $region15: #{plain_generator_forward.2} parent=1 // pred_check_branch
      %41 = sbr.rel (0) target = $region17
    $region16: #{plain_generator_forward.2} parent=1 // pred_region
      _
    $region17: #{plain_generator_forward.2} parent=1 // pred_fallthru
      _
    // Predicated region
    $region18: #{plain_generator_forward.2} parent=1 // pred_check
      _
    $region19: #{plain_generator_forward.2} parent=1 // pred_check_branch
      %43 = sbr.rel (0) target = $region21
    $region20: #{plain_generator_forward.2} parent=1 // pred_region
      _
    $region21: #{plain_generator_forward.2} parent=1 // pred_fallthru
      _
    // Predicated region
    $region22: #{plain_generator_forward.2} parent=1 // pred_check
      _
    $region23: #{plain_generator_forward.2} parent=1 // pred_check_branch
      %45 = sbr.rel (0) target = $region25
    $region24: #{plain_generator_forward.2} parent=1 // pred_region
      _
    $region25: #{plain_generator_forward.2} parent=1 // pred_fallthru
      _
    // Predicated region
    $region26: #{plain_generator_forward.2} parent=1 // pred_check
      _
    $region27: #{plain_generator_forward.2} parent=1 // pred_check_branch
      %47 = sbr.rel (0) target = $region29
    $region28: #{plain_generator_forward.2} parent=1 // pred_region
      %49 = vsyncadd [#allocation3], 0
      %s50 = sshll.u32 %s6, 4
      %s51 = int_to_ptr.hbm [resolvable:$true] %s50
      %s52 = sshll.u32 [#allocation2], 4
      %s53 = int_to_ptr.vmem [resolvable:$true] %s52
      %58 = dma.hbm_to_vmem [thread:$0]  %s51, 2048, %s53, [#allocation3], 128, 128, 8
    $region29: #{plain_generator_forward.2} parent=1 // pred_fallthru
      _
    // Predicated region
    $region30: #{plain_generator_forward.2} parent=1 // pred_check
      _
    $region31: #{plain_generator_forward.2} parent=1 // pred_check_branch
      %60 = sbr.rel (0) target = $region33
    $region32: #{plain_generator_forward.2} parent=1 // pred_region
      _
    $region33: #{plain_generator_forward.2} parent=1 // pred_fallthru
      _
    // Predicated region
    $region34: #{plain_generator_forward.2} parent=1 // pred_check
      _
    $region35: #{plain_generator_forward.2} parent=1 // pred_check_branch
      %62 = sbr.rel (0) target = $region37
    $region36: #{plain_generator_forward.2} parent=1 // pred_region
      %64 = vsyncadd [#allocation6], 0
      %s65 = sshll.u32 %s8, 4
      %s66 = int_to_ptr.hbm [resolvable:$true] %s65
      %s67 = sshll.u32 [#allocation5], 4
      %s68 = int_to_ptr.vmem [resolvable:$true] %s67
      %73 = dma.hbm_to_vmem [thread:$0]  %s66, 2048, %s68, [#allocation6], 64, 64, 4
    $region37: #{plain_generator_forward.2} parent=1 // pred_fallthru
      _
    // Predicated region
    $region38: #{plain_generator_forward.2} parent=1 // pred_check
      _
    $region39: #{plain_generator_forward.2} parent=1 // pred_check_branch
      %75 = sbr.rel (0) target = $region41
    $region40: #{plain_generator_forward.2} parent=1 // pred_region
      _
    $region41: #{plain_generator_forward.2} parent=1 // pred_fallthru
      _
    // Predicated region
    $region42: #{plain_generator_forward.2} parent=1 // pred_check
      _
    $region43: #{plain_generator_forward.2} parent=1 // pred_check_branch
      %77 = sbr.rel (0) target = $region45
    $region44: #{plain_generator_forward.2} parent=1 // pred_region
      _
    $region45: #{plain_generator_forward.2} parent=1 // pred_fallthru
      _
    // Predicated region
    $region46: #{plain_generator_forward.2} parent=1 // pred_check
      _
    $region47: #{plain_generator_forward.2} parent=1 // pred_check_branch
      %79 = sbr.rel (0) target = $region49
    $region48: #{plain_generator_forward.2} parent=1 // pred_region
      _
    $region49: #{plain_generator_forward.2} parent=1 // pred_fallthru
      _
    // Predicated region
    $region50: #{plain_generator_forward.2} parent=1 // pred_check
      _
    $region51: #{plain_generator_forward.2} parent=1 // pred_check_branch
      %81 = sbr.rel (0) target = $region53
    $region52: #{plain_generator_forward.2} parent=1 // pred_region
      _
    $region53: #{plain_generator_forward.2} parent=1 // pred_fallthru
      _
    // Predicated region
    $region54: #{plain_generator_forward.2} parent=1 // pred_check
      _
    $region55: #{plain_generator_forward.2} parent=1 // pred_check_branch
      %83 = sbr.rel (0) target = $region57
    $region56: #{plain_generator_forward.2} parent=1 // pred_region
      _
    $region57: #{plain_generator_forward.2} parent=1 // pred_fallthru
      _
    // Predicated region
    $region58: #{plain_generator_forward.2} parent=1 // pred_check
      _
    $region59: #{plain_generator_forward.2} parent=1 // pred_check_branch
      %85 = sbr.rel (0) target = $region61
    $region60: #{plain_generator_forward.2} parent=1 // pred_region
      %87 = vsyncadd [#allocation6], 0
      %s88 = sshll.u32 %s14, 4
      %s89 = int_to_ptr.hbm [resolvable:$true] %s88
      %s90 = sshll.u32 [#allocation7], 4
      %s91 = int_to_ptr.vmem [resolvable:$true] %s90
      %96 = dma.hbm_to_vmem [thread:$0]  %s89, 2048, %s91, [#allocation6], 128, 128, 8
    $region61: #{plain_generator_forward.2} parent=1 // pred_fallthru
      _
    // Predicated region
    $region62: #{plain_generator_forward.2} parent=1 // pred_check
      _
    $region63: #{plain_generator_forward.2} parent=1 // pred_check_branch
      %98 = sbr.rel (0) target = $region65
    $region64: #{plain_generator_forward.2} parent=1 // pred_region
      _
    $region65: #{plain_generator_forward.2} parent=1 // pred_fallthru
      _
    // Predicated region
    $region66: #{plain_generator_forward.2} parent=1 // pred_check
      _
    $region67: #{plain_generator_forward.2} parent=1 // pred_check_branch
      %100 = sbr.rel (0) target = $region69
    $region68: #{plain_generator_forward.2} parent=1 // pred_region
      %102 = vsyncadd [#allocation9], 0
      %s103 = sshll.u32 %s16, 4
      %s104 = int_to_ptr.hbm [resolvable:$true] %s103
      %s105 = sshll.u32 [#allocation8], 4
      %s106 = int_to_ptr.vmem [resolvable:$true] %s105
      %111 = dma.hbm_to_vmem [thread:$0]  %s104, 2048, %s106, [#allocation9], 64, 64, 4
    $region69: #{plain_generator_forward.2} parent=1 // pred_fallthru
      _
    // Predicated region
    $region70: #{plain_generator_forward.2} parent=1 // pred_check
      _
    $region71: #{plain_generator_forward.2} parent=1 // pred_check_branch
      %113 = sbr.rel (0) target = $region73
    $region72: #{plain_generator_forward.2} parent=1 // pred_region
      %115 = vsyncadd [#allocation9], 0
      %s117 = sshll.u32 %s17, 4
      %s118 = int_to_ptr.hbm [resolvable:$true] %s117
      %s119 = sshll.u32 [#allocation10], 4
      %s120 = int_to_ptr.vmem [resolvable:$true] %s119
      %122 = dma.hbm_to_vmem [thread:$0]  %s118, 16, %s120, [#allocation9]
    $region73: #{plain_generator_forward.2} parent=1 // pred_fallthru
      _
    // Predicated region
    $region74: #{plain_generator_forward.2} parent=1 // pred_check
      _
    $region75: #{plain_generator_forward.2} parent=1 // pred_check_branch
      %124 = sbr.rel (0) target = $region77
    $region76: #{plain_generator_forward.2} parent=1 // pred_region
      _
    $region77: #{plain_generator_forward.2} parent=1 // pred_fallthru
      _
    // Predicated region
    $region78: #{plain_generator_forward.2} parent=1 // pred_check
      _
    $region79: #{plain_generator_forward.2} parent=1 // pred_check_branch
      %126 = sbr.rel (0) target = $region81
    $region80: #{plain_generator_forward.2} parent=1 // pred_region
      %128 = vsyncadd [#allocation12], 0
      %s130 = sshll.u32 %s19, 4
      %s131 = int_to_ptr.hbm [resolvable:$true] %s130
      %s132 = sshll.u32 [#allocation11], 4
      %s133 = int_to_ptr.vmem [resolvable:$true] %s132
      %135 = dma.hbm_to_vmem [thread:$0]  %s131, 16, %s133, [#allocation12]
    $region81: #{plain_generator_forward.2} parent=1 // pred_fallthru
      _
    // Predicated region
    $region82: #{plain_generator_forward.2} parent=1 // pred_check
      _
    $region83: #{plain_generator_forward.2} parent=1 // pred_check_branch
      %137 = sbr.rel (0) target = $region85
    $region84: #{plain_generator_forward.2} parent=1 // pred_region
      %139 = dma.done [#allocation3], 2048
    $region85: #{plain_generator_forward.2} parent=1 // pred_fallthru
      _
    // Predicated region
    $region86: #{plain_generator_forward.2} parent=1 // pred_check
      _
    $region87: #{plain_generator_forward.2} parent=1 // pred_check_branch
      %141 = sbr.rel (0) target = $region89
    $region88: #{plain_generator_forward.2} parent=1 // pred_region
      %143 = dma.done [#allocation6], 2048
    $region89: #{plain_generator_forward.2} parent=1 // pred_fallthru
      _
    // Predicated region
    $region90: #{plain_generator_forward.2} parent=1 // pred_check
      _
    $region91: #{plain_generator_forward.2} parent=1 // pred_check_branch
      %145 = sbr.rel (0) target = $region93
    $region92: #{plain_generator_forward.2} parent=1 // pred_region
      %147 = dma.done [#allocation6], 2048
    $region93: #{plain_generator_forward.2} parent=1 // pred_fallthru
      _
    // Predicated region
    $region94: #{plain_generator_forward.2} parent=1 // pred_check
      _
    $region95: #{plain_generator_forward.2} parent=1 // pred_check_branch
      %149 = sbr.rel (0) target = $region97
    $region96: #{plain_generator_forward.2} parent=1 // pred_region
      %151 = dma.done [#allocation9], 2048
    $region97: #{plain_generator_forward.2} parent=1 // pred_fallthru
      _
    // Predicated region
    $region98: #{plain_generator_forward.2} parent=1 // pred_check
      _
    $region99: #{plain_generator_forward.2} parent=1 // pred_check_branch
      %153 = sbr.rel (0) target = $region101
    $region100: #{plain_generator_forward.2} parent=1 // pred_region
      %155 = dma.done [#allocation9], 16
    $region101: #{plain_generator_forward.2} parent=1 // pred_fallthru
      _
    // Predicated region
    $region102: #{plain_generator_forward.2} parent=1 // pred_check
      _
    $region103: #{plain_generator_forward.2} parent=1 // pred_check_branch
      %157 = sbr.rel (0) target = $region105
    $region104: #{plain_generator_forward.2} parent=1 // pred_region
      %159 = dma.done [#allocation12], 16
    $region105: #{plain_generator_forward.2} parent=1 // pred_fallthru
      _
    %v161 = vld [vmem:[%s0] sm:$0xff]
    %v162 = vld [vmem:[%s1] sm:$0xff]
    %v163 = vpack.c.bf16 %v161, %v161
    %v164 = vld [vmem:[%s2] sm:$0xf]
    %v165 = vld [vmem:[%s2 + $0x4] sm:$0xf]
    %v166 = vld [vmem:[%s3] sm:$0x1]
    %v168 = vperm.slane %v166, 0
    %v172 = vunpack.c.l.b16 %v164
    %v173 = vunpack.c.l.b16 %v165
    %v174 = vpack.c.b16 %v173, %v172
    %vm176 = vcmask 130048
    %v178 = vsel %vm176, %v163, 0
    %180 = vmatpush.bf16.msra.mxu0 0
    %181 = vmatpush.bf16.msra.mxu0 0
    %182 = vmatpush.bf16.msra.mxu0 0
    %183 = vmatpush.bf16.msra.mxu0 0
    %184 = vmatpush.bf16.msra.mxu0 0
    %185 = vmatpush.bf16.msra.mxu0 0
    %186 = vmatpush.bf16.msra.mxu0 0
    %187 = vmatpush.bf16.msra.mxu0 %v174
    %188 = vmatmul.bf16.gmra.mxu0 %v178
    %v189 = vpop.f32.mrf.mxu0
    %v190 = vadd.f32 %v168, %v189
    %v191 = vpop.f32.mrf.mxu0
    %192 = vdwg.mxu0
    %vm193 = vcmp.gt.f32.partialorder %v190, 0.0
    %v194 = vmul.f32 %v190, 0.01
    %v195 = vsel %vm193, %v190, %v194
    %v196 = vpack.c.bf16 %v195, %v195
    %v197 = vld [vmem:[%s4] sm:$0xf]
    %v198 = vld [vmem:[%s4 + $0x4] sm:$0xf]
    %v199 = vld [vmem:[%s4 + $0x8] sm:$0xf]
    %v200 = vld [vmem:[%s4 + $0xc] sm:$0xf]
    %v201 = vld [vmem:[%s5] sm:$0x1]
    %v203 = vperm.slane %v201, 0
    %v209 = vunpack.c.l.b16 %v197
    %v210 = vunpack.c.l.b16 %v198
    %v211 = vunpack.c.l.b16 %v199
    %v212 = vunpack.c.l.b16 %v200
    %v213 = vpack.c.b16 %v210, %v209
    %v214 = vpack.c.b16 %v212, %v211
    %vm217 = vcmask 261120
    %v219 = vsel %vm217, %v196, 0
    %221 = vmatpush.bf16.msra.mxu0 0
    %222 = vmatpush.bf16.msra.mxu0 0
    %223 = vmatpush.bf16.msra.mxu0 0
    %224 = vmatpush.bf16.msra.mxu0 0
    %225 = vmatpush.bf16.msra.mxu0 0
    %226 = vmatpush.bf16.msra.mxu0 0
    %227 = vmatpush.bf16.msra.mxu0 %v214
    %228 = vmatpush.bf16.msra.mxu0 %v213
    %229 = vmatmul.bf16.gmra.mxu0 %v219
    %v230 = vpop.f32.mrf.mxu0
    %v231 = vadd.f32 %v203, %v230
    %v232 = vpop.f32.mrf.mxu0
    %233 = vdwg.mxu0
    %vm234 = vcmp.gt.f32.partialorder %v231, 0.0
    %v235 = vmul.f32 %v231, 0.01
    %v236 = vsel %vm234, %v231, %v235
    %v237 = vpack.c.bf16 %v236, %v236
    %v238 = vld [vmem:[#allocation2] sm:$0xff]
    %v239 = vld [vmem:[#allocation2 + $0x8] sm:$0xff]
    %v240 = vld [vmem:[#allocation2 + $0x10] sm:$0xff]
    %v241 = vld [vmem:[#allocation2 + $0x18] sm:$0xff]
    %v242 = vld [vmem:[#allocation2 + $0x20] sm:$0xff]
    %v243 = vld [vmem:[#allocation2 + $0x28] sm:$0xff]
    %v244 = vld [vmem:[#allocation2 + $0x30] sm:$0xff]
    %v245 = vld [vmem:[#allocation2 + $0x38] sm:$0xff]
    %v246 = vld [vmem:[#allocation2 + $0x40] sm:$0xff]
    %v247 = vld [vmem:[#allocation2 + $0x48] sm:$0xff]
    %v248 = vld [vmem:[#allocation2 + $0x50] sm:$0xff]
    %v249 = vld [vmem:[#allocation2 + $0x58] sm:$0xff]
    %v250 = vld [vmem:[#allocation2 + $0x60] sm:$0xff]
    %v251 = vld [vmem:[#allocation2 + $0x68] sm:$0xff]
    %v252 = vld [vmem:[#allocation2 + $0x70] sm:$0xff]
    %v253 = vld [vmem:[#allocation2 + $0x78] sm:$0xff]
    %v254 = vld [vmem:[%s7] sm:$0x3]
    %v256 = vperm.slane %v254, 0
    %v257 = vperm.slane %v254, 1
    %v276 = vunpack.c.l.b16 %v238
    %v277 = vunpack.c.h.b16 %v238
    %v278 = vunpack.c.l.b16 %v239
    %v279 = vunpack.c.h.b16 %v239
    %v280 = vunpack.c.l.b16 %v240
    %v281 = vunpack.c.h.b16 %v240
    %v282 = vunpack.c.l.b16 %v241
    %v283 = vunpack.c.h.b16 %v241
    %v284 = vunpack.c.l.b16 %v242
    %v285 = vunpack.c.h.b16 %v242
    %v286 = vunpack.c.l.b16 %v243
    %v287 = vunpack.c.h.b16 %v243
    %v288 = vunpack.c.l.b16 %v244
    %v289 = vunpack.c.h.b16 %v244
    %v290 = vunpack.c.l.b16 %v245
    %v291 = vunpack.c.h.b16 %v245
    %v292 = vunpack.c.l.b16 %v246
    %v293 = vunpack.c.h.b16 %v246
    %v294 = vunpack.c.l.b16 %v247
    %v295 = vunpack.c.h.b16 %v247
    %v296 = vunpack.c.l.b16 %v248
    %v297 = vunpack.c.h.b16 %v248
    %v298 = vunpack.c.l.b16 %v249
    %v299 = vunpack.c.h.b16 %v249
    %v300 = vunpack.c.l.b16 %v250
    %v301 = vunpack.c.h.b16 %v250
    %v302 = vunpack.c.l.b16 %v251
    %v303 = vunpack.c.h.b16 %v251
    %v304 = vunpack.c.l.b16 %v252
    %v305 = vunpack.c.h.b16 %v252
    %v306 = vunpack.c.l.b16 %v253
    %v307 = vunpack.c.h.b16 %v253
    %v308 = vpack.c.b16 %v278, %v276
    %v309 = vpack.c.b16 %v279, %v277
    %v310 = vpack.c.b16 %v282, %v280
    %v311 = vpack.c.b16 %v283, %v281
    %v312 = vpack.c.b16 %v286, %v284
    %v313 = vpack.c.b16 %v287, %v285
    %v314 = vpack.c.b16 %v290, %v288
    %v315 = vpack.c.b16 %v291, %v289
    %v316 = vpack.c.b16 %v294, %v292
    %v317 = vpack.c.b16 %v295, %v293
    %v318 = vpack.c.b16 %v298, %v296
    %v319 = vpack.c.b16 %v299, %v297
    %v320 = vpack.c.b16 %v302, %v300
    %v321 = vpack.c.b16 %v303, %v301
    %v322 = vpack.c.b16 %v306, %v304
    %v323 = vpack.c.b16 %v307, %v305
    %340 = vmatpush.bf16.msra.mxu0 %v322
    %341 = vmatpush.bf16.msra.mxu0 %v320
    %342 = vmatpush.bf16.msra.mxu0 %v318
    %343 = vmatpush.bf16.msra.mxu0 %v316
    %344 = vmatpush.bf16.msra.mxu0 %v314
    %345 = vmatpush.bf16.msra.mxu0 %v312
    %346 = vmatpush.bf16.msra.mxu0 %v310
    %347 = vmatpush.bf16.msra.mxu0 %v308
    %348 = vmatmul.bf16.gmra.mxu0 %v237
    %v349 = vpop.f32.mrf.mxu0
    %v350 = vadd.f32 %v256, %v349
    %v351 = vpop.f32.mrf.mxu0
    %352 = vdwg.mxu0
    %353 = vmatpush.bf16.msra.mxu0 %v323
    %354 = vmatpush.bf16.msra.mxu0 %v321
    %355 = vmatpush.bf16.msra.mxu0 %v319
    %356 = vmatpush.bf16.msra.mxu0 %v317
    %357 = vmatpush.bf16.msra.mxu0 %v315
    %358 = vmatpush.bf16.msra.mxu0 %v313
    %359 = vmatpush.bf16.msra.mxu0 %v311
    %360 = vmatpush.bf16.msra.mxu0 %v309
    %361 = vmatmul.bf16.gmra.mxu0 %v237
    %v362 = vpop.f32.mrf.mxu0
    %v363 = vadd.f32 %v257, %v362
    %v364 = vpop.f32.mrf.mxu0
    %365 = vdwg.mxu0
    %vm366 = vcmp.gt.f32.partialorder %v350, 0.0
    %vm367 = vcmp.gt.f32.partialorder %v363, 0.0
    %v368 = vmul.f32 %v350, 0.01
    %v369 = vmul.f32 %v363, 0.01
    %v370 = vsel %vm366, %v350, %v368
    %v371 = vsel %vm367, %v363, %v369
    %v372 = vpack.c.bf16 %v370, %v370
    %v373 = vpack.c.bf16 %v371, %v371
    %v374 = vld [vmem:[#allocation5] sm:$0xf]
    %v375 = vld [vmem:[#allocation5 + $0x4] sm:$0xf]
    %v376 = vld [vmem:[#allocation5 + $0x8] sm:$0xf]
    %v377 = vld [vmem:[#allocation5 + $0xc] sm:$0xf]
    %v378 = vld [vmem:[#allocation5 + $0x10] sm:$0xf]
    %v379 = vld [vmem:[#allocation5 + $0x14] sm:$0xf]
    %v380 = vld [vmem:[#allocation5 + $0x18] sm:$0xf]
    %v381 = vld [vmem:[#allocation5 + $0x1c] sm:$0xf]
    %v382 = vld [vmem:[#allocation5 + $0x20] sm:$0xf]
    %v383 = vld [vmem:[#allocation5 + $0x24] sm:$0xf]
    %v384 = vld [vmem:[#allocation5 + $0x28] sm:$0xf]
    %v385 = vld [vmem:[#allocation5 + $0x2c] sm:$0xf]
    %v386 = vld [vmem:[#allocation5 + $0x30] sm:$0xf]
    %v387 = vld [vmem:[#allocation5 + $0x34] sm:$0xf]
    %v388 = vld [vmem:[#allocation5 + $0x38] sm:$0xf]
    %v389 = vld [vmem:[#allocation5 + $0x3c] sm:$0xf]
    %v390 = vld [vmem:[#allocation5 + $0x40] sm:$0xf]
    %v391 = vld [vmem:[#allocation5 + $0x44] sm:$0xf]
    %v392 = vld [vmem:[#allocation5 + $0x48] sm:$0xf]
    %v393 = vld [vmem:[#allocation5 + $0x4c] sm:$0xf]
    %v394 = vld [vmem:[#allocation5 + $0x50] sm:$0xf]
    %v395 = vld [vmem:[#allocation5 + $0x54] sm:$0xf]
    %v396 = vld [vmem:[#allocation5 + $0x58] sm:$0xf]
    %v397 = vld [vmem:[#allocation5 + $0x5c] sm:$0xf]
    %v398 = vld [vmem:[#allocation5 + $0x60] sm:$0xf]
    %v399 = vld [vmem:[#allocation5 + $0x64] sm:$0xf]
    %v400 = vld [vmem:[#allocation5 + $0x68] sm:$0xf]
    %v401 = vld [vmem:[#allocation5 + $0x6c] sm:$0xf]
    %v402 = vld [vmem:[#allocation5 + $0x70] sm:$0xf]
    %v403 = vld [vmem:[#allocation5 + $0x74] sm:$0xf]
    %v404 = vld [vmem:[#allocation5 + $0x78] sm:$0xf]
    %v405 = vld [vmem:[#allocation5 + $0x7c] sm:$0xf]
    %v406 = vld [vmem:[%s9] sm:$0x1]
    %v408 = vperm.slane %v406, 0
    %v442 = vunpack.c.l.b16 %v374
    %v443 = vunpack.c.l.b16 %v375
    %v444 = vunpack.c.l.b16 %v376
    %v445 = vunpack.c.l.b16 %v377
    %v446 = vunpack.c.l.b16 %v378
    %v447 = vunpack.c.l.b16 %v379
    %v448 = vunpack.c.l.b16 %v380
    %v449 = vunpack.c.l.b16 %v381
    %v450 = vunpack.c.l.b16 %v382
    %v451 = vunpack.c.l.b16 %v383
    %v452 = vunpack.c.l.b16 %v384
    %v453 = vunpack.c.l.b16 %v385
    %v454 = vunpack.c.l.b16 %v386
    %v455 = vunpack.c.l.b16 %v387
    %v456 = vunpack.c.l.b16 %v388
    %v457 = vunpack.c.l.b16 %v389
    %v458 = vunpack.c.l.b16 %v390
    %v459 = vunpack.c.l.b16 %v391
    %v460 = vunpack.c.l.b16 %v392
    %v461 = vunpack.c.l.b16 %v393
    %v462 = vunpack.c.l.b16 %v394
    %v463 = vunpack.c.l.b16 %v395
    %v464 = vunpack.c.l.b16 %v396
    %v465 = vunpack.c.l.b16 %v397
    %v466 = vunpack.c.l.b16 %v398
    %v467 = vunpack.c.l.b16 %v399
    %v468 = vunpack.c.l.b16 %v400
    %v469 = vunpack.c.l.b16 %v401
    %v470 = vunpack.c.l.b16 %v402
    %v471 = vunpack.c.l.b16 %v403
    %v472 = vunpack.c.l.b16 %v404
    %v473 = vunpack.c.l.b16 %v405
    %v474 = vpack.c.b16 %v443, %v442
    %v475 = vpack.c.b16 %v445, %v444
    %v476 = vpack.c.b16 %v447, %v446
    %v477 = vpack.c.b16 %v449, %v448
    %v478 = vpack.c.b16 %v451, %v450
    %v479 = vpack.c.b16 %v453, %v452
    %v480 = vpack.c.b16 %v455, %v454
    %v481 = vpack.c.b16 %v457, %v456
    %v482 = vpack.c.b16 %v459, %v458
    %v483 = vpack.c.b16 %v461, %v460
    %v484 = vpack.c.b16 %v463, %v462
    %v485 = vpack.c.b16 %v465, %v464
    %v486 = vpack.c.b16 %v467, %v466
    %v487 = vpack.c.b16 %v469, %v468
    %v488 = vpack.c.b16 %v471, %v470
    %v489 = vpack.c.b16 %v473, %v472
    %506 = vmatpush.bf16.msra.mxu0 %v481
    %507 = vmatpush.bf16.msra.mxu0 %v480
    %508 = vmatpush.bf16.msra.mxu0 %v479
    %509 = vmatpush.bf16.msra.mxu0 %v478
    %510 = vmatpush.bf16.msra.mxu0 %v477
    %511 = vmatpush.bf16.msra.mxu0 %v476
    %512 = vmatpush.bf16.msra.mxu0 %v475
    %513 = vmatpush.bf16.msra.mxu0 %v474
    %514 = vmatmul.bf16.gmra.mxu0 %v372
    %v515 = vpop.f32.mrf.mxu0
    %v516 = vadd.f32 %v408, %v515
    %v517 = vpop.f32.mrf.mxu0
    %518 = vdwg.mxu0
    %519 = vmatpush.bf16.msra.mxu0 %v489
    %520 = vmatpush.bf16.msra.mxu0 %v488
    %521 = vmatpush.bf16.msra.mxu0 %v487
    %522 = vmatpush.bf16.msra.mxu0 %v486
    %523 = vmatpush.bf16.msra.mxu0 %v485
    %524 = vmatpush.bf16.msra.mxu0 %v484
    %525 = vmatpush.bf16.msra.mxu0 %v483
    %526 = vmatpush.bf16.msra.mxu0 %v482
    %527 = vmatmul.bf16.gmra.mxu0 %v373
    %v528 = vpop.f32.mrf.mxu0
    %v529 = vadd.f32 %v516, %v528
    %v530 = vpop.f32.mrf.mxu0
    %531 = vdwg.mxu0
    %vm532 = vcmp.gt.f32.partialorder %v529, 0.0
    %v533 = vmul.f32 %v529, 0.01
    %v534 = vsel %vm532, %v529, %v533
    %v535 = vpack.c.bf16 %v534, %v534
    %v536 = vld [vmem:[%s18] sm:$0xf]
    %v537 = vld [vmem:[%s18 + $0x4] sm:$0xf]
    %v538 = vld [vmem:[%s18 + $0x8] sm:$0xf]
    %v539 = vld [vmem:[%s18 + $0xc] sm:$0xf]
    %v540 = vld [vmem:[%s18 + $0x10] sm:$0xf]
    %v541 = vld [vmem:[%s18 + $0x14] sm:$0xf]
    %v542 = vld [vmem:[%s18 + $0x18] sm:$0xf]
    %v543 = vld [vmem:[%s18 + $0x1c] sm:$0xf]
    %v544 = vld [vmem:[%s18 + $0x20] sm:$0xf]
    %v545 = vld [vmem:[%s18 + $0x24] sm:$0xf]
    %v546 = vld [vmem:[%s18 + $0x28] sm:$0xf]
    %v547 = vld [vmem:[%s18 + $0x2c] sm:$0xf]
    %v548 = vld [vmem:[%s18 + $0x30] sm:$0xf]
    %v549 = vld [vmem:[%s18 + $0x34] sm:$0xf]
    %v550 = vld [vmem:[%s18 + $0x38] sm:$0xf]
    %v551 = vld [vmem:[%s18 + $0x3c] sm:$0xf]
    %v552 = vld [vmem:[#allocation11] sm:$0x1]
    %v554 = vperm.slane %v552, 0
    %v572 = vunpack.c.l.b16 %v536
    %v573 = vunpack.c.l.b16 %v537
    %v574 = vunpack.c.l.b16 %v538
    %v575 = vunpack.c.l.b16 %v539
    %v576 = vunpack.c.l.b16 %v540
    %v577 = vunpack.c.l.b16 %v541
    %v578 = vunpack.c.l.b16 %v542
    %v579 = vunpack.c.l.b16 %v543
    %v580 = vunpack.c.l.b16 %v544
    %v581 = vunpack.c.l.b16 %v545
    %v582 = vunpack.c.l.b16 %v546
    %v583 = vunpack.c.l.b16 %v547
    %v584 = vunpack.c.l.b16 %v548
    %v585 = vunpack.c.l.b16 %v549
    %v586 = vunpack.c.l.b16 %v550
    %v587 = vunpack.c.l.b16 %v551
    %v588 = vpack.c.b16 %v573, %v572
    %v589 = vpack.c.b16 %v575, %v574
    %v590 = vpack.c.b16 %v577, %v576
    %v591 = vpack.c.b16 %v579, %v578
    %v592 = vpack.c.b16 %v581, %v580
    %v593 = vpack.c.b16 %v583, %v582
    %v594 = vpack.c.b16 %v585, %v584
    %v595 = vpack.c.b16 %v587, %v586
    %604 = vmatpush.bf16.msra.mxu0 %v595
    %605 = vmatpush.bf16.msra.mxu0 %v594
    %606 = vmatpush.bf16.msra.mxu0 %v593
    %607 = vmatpush.bf16.msra.mxu0 %v592
    %608 = vmatpush.bf16.msra.mxu0 %v591
    %609 = vmatpush.bf16.msra.mxu0 %v590
    %610 = vmatpush.bf16.msra.mxu0 %v589
    %611 = vmatpush.bf16.msra.mxu0 %v588
    %612 = vmatmul.bf16.gmra.mxu0 %v535
    %v613 = vpop.f32.mrf.mxu0
    %v614 = vadd.f32 %v554, %v613
    %v615 = vpop.f32.mrf.mxu0
    %616 = vdwg.mxu0
    %v617 = vxor.u32 %v614, 2147483648
    %v618 = vmul.f32 %v617, 1.442695
    %v619 = vpow.pop %v618
    %v620 = vadd.f32 %v619, 1.0
    %v621 = vrcp.pop %v620
    %v622 = vmul.f32 %v620, %v621
    %v623 = vsub.f32 1.0, %v622
    %v624 = vmul.f32 %v621, %v623
    %v625 = vadd.f32 %v621, %v624
    %vm626 = vweird.f32 %v620
    %vm627 = vweird.f32 %v621
    %vm628 = vmor %vm626, %vm627
    %v629 = vsel %vm628, %v621, %v625
    %v630 = vand.u32 2147483647, %v620
    %vm631 = vcmp.eq.f32.partialorder %v630, 8.507059e+37
    %v632 = vand.u32 %v620, 2147483648
    %v633 = vor.u32 1.1754944e-38, %v632
    %v634 = vsel %vm631, %v633, %v629
    %v635 = vmul.f32 1.0, %v634
    %vm636 = vcmask 523264
    %637 = vst.msk [vmem:[#allocation13] sm:$0xff] %vm636, %v635
    %v638 = vpack.c.bf16 %v162, %v162
    %v639 = vld [vmem:[%s10] sm:$0xf]
    %v640 = vld [vmem:[%s10 + $0x4] sm:$0xf]
    %v641 = vld [vmem:[%s11] sm:$0x1]
    %v643 = vperm.slane %v641, 0
    %v647 = vunpack.c.l.b16 %v639
    %v648 = vunpack.c.l.b16 %v640
    %v649 = vpack.c.b16 %v648, %v647
    %v652 = vsel %vm176, %v638, 0
    %654 = vmatpush.bf16.msra.mxu0 0
    %655 = vmatpush.bf16.msra.mxu0 0
    %656 = vmatpush.bf16.msra.mxu0 0
    %657 = vmatpush.bf16.msra.mxu0 0
    %658 = vmatpush.bf16.msra.mxu0 0
    %659 = vmatpush.bf16.msra.mxu0 0
    %660 = vmatpush.bf16.msra.mxu0 0
    %661 = vmatpush.bf16.msra.mxu0 %v649
    %662 = vmatmul.bf16.gmra.mxu0 %v652
    %v663 = vpop.f32.mrf.mxu0
    %v664 = vadd.f32 %v643, %v663
    %v665 = vpop.f32.mrf.mxu0
    %666 = vdwg.mxu0
    %vm667 = vcmp.gt.f32.partialorder %v664, 0.0
    %v668 = vmul.f32 %v664, 0.01
    %v669 = vsel %vm667, %v664, %v668
    %v670 = vpack.c.bf16 %v669, %v669
    %v671 = vld [vmem:[%s12] sm:$0xf]
    %v672 = vld [vmem:[%s12 + $0x4] sm:$0xf]
    %v673 = vld [vmem:[%s12 + $0x8] sm:$0xf]
    %v674 = vld [vmem:[%s12 + $0xc] sm:$0xf]
    %v675 = vld [vmem:[%s13] sm:$0x1]
    %v677 = vperm.slane %v675, 0
    %v683 = vunpack.c.l.b16 %v671
    %v684 = vunpack.c.l.b16 %v672
    %v685 = vunpack.c.l.b16 %v673
    %v686 = vunpack.c.l.b16 %v674
    %v687 = vpack.c.b16 %v684, %v683
    %v688 = vpack.c.b16 %v686, %v685
    %v692 = vsel %vm217, %v670, 0
    %694 = vmatpush.bf16.msra.mxu0 0
    %695 = vmatpush.bf16.msra.mxu0 0
    %696 = vmatpush.bf16.msra.mxu0 0
    %697 = vmatpush.bf16.msra.mxu0 0
    %698 = vmatpush.bf16.msra.mxu0 0
    %699 = vmatpush.bf16.msra.mxu0 0
    %700 = vmatpush.bf16.msra.mxu0 %v688
    %701 = vmatpush.bf16.msra.mxu0 %v687
    %702 = vmatmul.bf16.gmra.mxu0 %v692
    %v703 = vpop.f32.mrf.mxu0
    %v704 = vadd.f32 %v677, %v703
    %v705 = vpop.f32.mrf.mxu0
    %706 = vdwg.mxu0
    %vm707 = vcmp.gt.f32.partialorder %v704, 0.0
    %v708 = vmul.f32 %v704, 0.01
    %v709 = vsel %vm707, %v704, %v708
    %v710 = vpack.c.bf16 %v709, %v709
    %v711 = vld [vmem:[#allocation7] sm:$0xff]
    %v712 = vld [vmem:[#allocation7 + $0x8] sm:$0xff]
    %v713 = vld [vmem:[#allocation7 + $0x10] sm:$0xff]
    %v714 = vld [vmem:[#allocation7 + $0x18] sm:$0xff]
    %v715 = vld [vmem:[#allocation7 + $0x20] sm:$0xff]
    %v716 = vld [vmem:[#allocation7 + $0x28] sm:$0xff]
    %v717 = vld [vmem:[#allocation7 + $0x30] sm:$0xff]
    %v718 = vld [vmem:[#allocation7 + $0x38] sm:$0xff]
    %v719 = vld [vmem:[#allocation7 + $0x40] sm:$0xff]
    %v720 = vld [vmem:[#allocation7 + $0x48] sm:$0xff]
    %v721 = vld [vmem:[#allocation7 + $0x50] sm:$0xff]
    %v722 = vld [vmem:[#allocation7 + $0x58] sm:$0xff]
    %v723 = vld [vmem:[#allocation7 + $0x60] sm:$0xff]
    %v724 = vld [vmem:[#allocation7 + $0x68] sm:$0xff]
    %v725 = vld [vmem:[#allocation7 + $0x70] sm:$0xff]
    %v726 = vld [vmem:[#allocation7 + $0x78] sm:$0xff]
    %v727 = vld [vmem:[%s15] sm:$0x3]
    %v729 = vperm.slane %v727, 0
    %v730 = vperm.slane %v727, 1
    %v749 = vunpack.c.l.b16 %v711
    %v750 = vunpack.c.h.b16 %v711
    %v751 = vunpack.c.l.b16 %v712
    %v752 = vunpack.c.h.b16 %v712
    %v753 = vunpack.c.l.b16 %v713
    %v754 = vunpack.c.h.b16 %v713
    %v755 = vunpack.c.l.b16 %v714
    %v756 = vunpack.c.h.b16 %v714
    %v757 = vunpack.c.l.b16 %v715
    %v758 = vunpack.c.h.b16 %v715
    %v759 = vunpack.c.l.b16 %v716
    %v760 = vunpack.c.h.b16 %v716
    %v761 = vunpack.c.l.b16 %v717
    %v762 = vunpack.c.h.b16 %v717
    %v763 = vunpack.c.l.b16 %v718
    %v764 = vunpack.c.h.b16 %v718
    %v765 = vunpack.c.l.b16 %v719
    %v766 = vunpack.c.h.b16 %v719
    %v767 = vunpack.c.l.b16 %v720
    %v768 = vunpack.c.h.b16 %v720
    %v769 = vunpack.c.l.b16 %v721
    %v770 = vunpack.c.h.b16 %v721
    %v771 = vunpack.c.l.b16 %v722
    %v772 = vunpack.c.h.b16 %v722
    %v773 = vunpack.c.l.b16 %v723
    %v774 = vunpack.c.h.b16 %v723
    %v775 = vunpack.c.l.b16 %v724
    %v776 = vunpack.c.h.b16 %v724
    %v777 = vunpack.c.l.b16 %v725
    %v778 = vunpack.c.h.b16 %v725
    %v779 = vunpack.c.l.b16 %v726
    %v780 = vunpack.c.h.b16 %v726
    %v781 = vpack.c.b16 %v751, %v749
    %v782 = vpack.c.b16 %v752, %v750
    %v783 = vpack.c.b16 %v755, %v753
    %v784 = vpack.c.b16 %v756, %v754
    %v785 = vpack.c.b16 %v759, %v757
    %v786 = vpack.c.b16 %v760, %v758
    %v787 = vpack.c.b16 %v763, %v761
    %v788 = vpack.c.b16 %v764, %v762
    %v789 = vpack.c.b16 %v767, %v765
    %v790 = vpack.c.b16 %v768, %v766
    %v791 = vpack.c.b16 %v771, %v769
    %v792 = vpack.c.b16 %v772, %v770
    %v793 = vpack.c.b16 %v775, %v773
    %v794 = vpack.c.b16 %v776, %v774
    %v795 = vpack.c.b16 %v779, %v777
    %v796 = vpack.c.b16 %v780, %v778
    %813 = vmatpush.bf16.msra.mxu0 %v795
    %814 = vmatpush.bf16.msra.mxu0 %v793
    %815 = vmatpush.bf16.msra.mxu0 %v791
    %816 = vmatpush.bf16.msra.mxu0 %v789
    %817 = vmatpush.bf16.msra.mxu0 %v787
    %818 = vmatpush.bf16.msra.mxu0 %v785
    %819 = vmatpush.bf16.msra.mxu0 %v783
    %820 = vmatpush.bf16.msra.mxu0 %v781
    %821 = vmatmul.bf16.gmra.mxu0 %v710
    %v822 = vpop.f32.mrf.mxu0
    %v823 = vadd.f32 %v729, %v822
    %v824 = vpop.f32.mrf.mxu0
    %825 = vdwg.mxu0
    %826 = vmatpush.bf16.msra.mxu0 %v796
    %827 = vmatpush.bf16.msra.mxu0 %v794
    %828 = vmatpush.bf16.msra.mxu0 %v792
    %829 = vmatpush.bf16.msra.mxu0 %v790
    %830 = vmatpush.bf16.msra.mxu0 %v788
    %831 = vmatpush.bf16.msra.mxu0 %v786
    %832 = vmatpush.bf16.msra.mxu0 %v784
    %833 = vmatpush.bf16.msra.mxu0 %v782
    %834 = vmatmul.bf16.gmra.mxu0 %v710
    %v835 = vpop.f32.mrf.mxu0
    %v836 = vadd.f32 %v730, %v835
    %v837 = vpop.f32.mrf.mxu0
    %838 = vdwg.mxu0
    %vm839 = vcmp.gt.f32.partialorder %v823, 0.0
    %vm840 = vcmp.gt.f32.partialorder %v836, 0.0
    %v841 = vmul.f32 %v823, 0.01
    %v842 = vmul.f32 %v836, 0.01
    %v843 = vsel %vm839, %v823, %v841
    %v844 = vsel %vm840, %v836, %v842
    %v845 = vpack.c.bf16 %v843, %v843
    %v846 = vpack.c.bf16 %v844, %v844
    %v847 = vld [vmem:[#allocation8] sm:$0xf]
    %v848 = vld [vmem:[#allocation8 + $0x4] sm:$0xf]
    %v849 = vld [vmem:[#allocation8 + $0x8] sm:$0xf]
    %v850 = vld [vmem:[#allocation8 + $0xc] sm:$0xf]
    %v851 = vld [vmem:[#allocation8 + $0x10] sm:$0xf]
    %v852 = vld [vmem:[#allocation8 + $0x14] sm:$0xf]
    %v853 = vld [vmem:[#allocation8 + $0x18] sm:$0xf]
    %v854 = vld [vmem:[#allocation8 + $0x1c] sm:$0xf]
    %v855 = vld [vmem:[#allocation8 + $0x20] sm:$0xf]
    %v856 = vld [vmem:[#allocation8 + $0x24] sm:$0xf]
    %v857 = vld [vmem:[#allocation8 + $0x28] sm:$0xf]
    %v858 = vld [vmem:[#allocation8 + $0x2c] sm:$0xf]
    %v859 = vld [vmem:[#allocation8 + $0x30] sm:$0xf]
    %v860 = vld [vmem:[#allocation8 + $0x34] sm:$0xf]
    %v861 = vld [vmem:[#allocation8 + $0x38] sm:$0xf]
    %v862 = vld [vmem:[#allocation8 + $0x3c] sm:$0xf]
    %v863 = vld [vmem:[#allocation8 + $0x40] sm:$0xf]
    %v864 = vld [vmem:[#allocation8 + $0x44] sm:$0xf]
    %v865 = vld [vmem:[#allocation8 + $0x48] sm:$0xf]
    %v866 = vld [vmem:[#allocation8 + $0x4c] sm:$0xf]
    %v867 = vld [vmem:[#allocation8 + $0x50] sm:$0xf]
    %v868 = vld [vmem:[#allocation8 + $0x54] sm:$0xf]
    %v869 = vld [vmem:[#allocation8 + $0x58] sm:$0xf]
    %v870 = vld [vmem:[#allocation8 + $0x5c] sm:$0xf]
    %v871 = vld [vmem:[#allocation8 + $0x60] sm:$0xf]
    %v872 = vld [vmem:[#allocation8 + $0x64] sm:$0xf]
    %v873 = vld [vmem:[#allocation8 + $0x68] sm:$0xf]
    %v874 = vld [vmem:[#allocation8 + $0x6c] sm:$0xf]
    %v875 = vld [vmem:[#allocation8 + $0x70] sm:$0xf]
    %v876 = vld [vmem:[#allocation8 + $0x74] sm:$0xf]
    %v877 = vld [vmem:[#allocation8 + $0x78] sm:$0xf]
    %v878 = vld [vmem:[#allocation8 + $0x7c] sm:$0xf]
    %v879 = vld [vmem:[#allocation10] sm:$0x1]
    %v881 = vperm.slane %v879, 0
    %v915 = vunpack.c.l.b16 %v847
    %v916 = vunpack.c.l.b16 %v848
    %v917 = vunpack.c.l.b16 %v849
    %v918 = vunpack.c.l.b16 %v850
    %v919 = vunpack.c.l.b16 %v851
    %v920 = vunpack.c.l.b16 %v852
    %v921 = vunpack.c.l.b16 %v853
    %v922 = vunpack.c.l.b16 %v854
    %v923 = vunpack.c.l.b16 %v855
    %v924 = vunpack.c.l.b16 %v856
    %v925 = vunpack.c.l.b16 %v857
    %v926 = vunpack.c.l.b16 %v858
    %v927 = vunpack.c.l.b16 %v859
    %v928 = vunpack.c.l.b16 %v860
    %v929 = vunpack.c.l.b16 %v861
    %v930 = vunpack.c.l.b16 %v862
    %v931 = vunpack.c.l.b16 %v863
    %v932 = vunpack.c.l.b16 %v864
    %v933 = vunpack.c.l.b16 %v865
    %v934 = vunpack.c.l.b16 %v866
    %v935 = vunpack.c.l.b16 %v867
    %v936 = vunpack.c.l.b16 %v868
    %v937 = vunpack.c.l.b16 %v869
    %v938 = vunpack.c.l.b16 %v870
    %v939 = vunpack.c.l.b16 %v871
    %v940 = vunpack.c.l.b16 %v872
    %v941 = vunpack.c.l.b16 %v873
    %v942 = vunpack.c.l.b16 %v874
    %v943 = vunpack.c.l.b16 %v875
    %v944 = vunpack.c.l.b16 %v876
    %v945 = vunpack.c.l.b16 %v877
    %v946 = vunpack.c.l.b16 %v878
    %v947 = vpack.c.b16 %v916, %v915
    %v948 = vpack.c.b16 %v918, %v917
    %v949 = vpack.c.b16 %v920, %v919
    %v950 = vpack.c.b16 %v922, %v921
    %v951 = vpack.c.b16 %v924, %v923
    %v952 = vpack.c.b16 %v926, %v925
    %v953 = vpack.c.b16 %v928, %v927
    %v954 = vpack.c.b16 %v930, %v929
    %v955 = vpack.c.b16 %v932, %v931
    %v956 = vpack.c.b16 %v934, %v933
    %v957 = vpack.c.b16 %v936, %v935
    %v958 = vpack.c.b16 %v938, %v937
    %v959 = vpack.c.b16 %v940, %v939
    %v960 = vpack.c.b16 %v942, %v941
    %v961 = vpack.c.b16 %v944, %v943
    %v962 = vpack.c.b16 %v946, %v945
    %979 = vmatpush.bf16.msra.mxu0 %v954
    %980 = vmatpush.bf16.msra.mxu0 %v953
    %981 = vmatpush.bf16.msra.mxu0 %v952
    %982 = vmatpush.bf16.msra.mxu0 %v951
    %983 = vmatpush.bf16.msra.mxu0 %v950
    %984 = vmatpush.bf16.msra.mxu0 %v949
    %985 = vmatpush.bf16.msra.mxu0 %v948
    %986 = vmatpush.bf16.msra.mxu0 %v947
    %987 = vmatmul.bf16.gmra.mxu0 %v845
    %v988 = vpop.f32.mrf.mxu0
    %v989 = vadd.f32 %v881, %v988
    %v990 = vpop.f32.mrf.mxu0
    %991 = vdwg.mxu0
    %992 = vmatpush.bf16.msra.mxu0 %v962
    %993 = vmatpush.bf16.msra.mxu0 %v961
    %994 = vmatpush.bf16.msra.mxu0 %v960
    %995 = vmatpush.bf16.msra.mxu0 %v959
    %996 = vmatpush.bf16.msra.mxu0 %v958
    %997 = vmatpush.bf16.msra.mxu0 %v957
    %998 = vmatpush.bf16.msra.mxu0 %v956
    %999 = vmatpush.bf16.msra.mxu0 %v955
    %1000 = vmatmul.bf16.gmra.mxu0 %v846
    %v1001 = vpop.f32.mrf.mxu0
    %v1002 = vadd.f32 %v989, %v1001
    %v1003 = vpop.f32.mrf.mxu0
    %1004 = vdwg.mxu0
    %vm1005 = vcmp.gt.f32.partialorder %v1002, 0.0
    %v1006 = vmul.f32 %v1002, 0.01
    %v1007 = vsel %vm1005, %v1002, %v1006
    %1008 = vst [vmem:[%s21] sm:$0xff] %v1007
    %s1009 = smul.u32 0, 8
    %v1010 = vlaneseq
    %v1011 = vshrl.u32 %v1010, 7
    %v1012 = vstv %s1009
    %v1013 = vadd.s32 %v1012, %v1011
    %vm1014 = vcmp.lt.s32.totalorder %v1013, 8
    %v1015 = vsel %vm1014, 1, 0
    %v1016 = vcvt.s32.f32 %v1015
    %v1017 = vmul.f32 %v1007, %v1016
    %v1018 = vrot.slane %v1017, 4
    %v1019 = vadd.f32 %v1017, %v1018
    %v1020 = vrot.slane %v1019, 2
    %v1021 = vadd.f32 %v1019, %v1020
    %v1022 = vrot.slane %v1021, 1
    %v1023 = vadd.f32 %v1021, %v1022
    %1024 = vst [vmem:[%s22] sm:$0x1] %v1023
    %v1025 = vmul.f32 %v1017, %v1007
    %v1026 = vrot.slane %v1025, 4
    %v1027 = vadd.f32 %v1025, %v1026
    %v1028 = vrot.slane %v1027, 2
    %v1029 = vadd.f32 %v1027, %v1028
    %v1030 = vrot.slane %v1029, 1
    %v1031 = vadd.f32 %v1029, %v1030
    %1032 = vst [vmem:[%s23] sm:$0x1] %v1031
    // Predicated region
    $region106: #{plain_generator_forward.2} parent=1 // pred_check
      _
    $region107: #{plain_generator_forward.2} parent=1 // pred_check_branch
      %1034 = sbr.rel (0) target = $region109
    $region108: #{plain_generator_forward.2} parent=1 // pred_region
      %1036 = vsyncadd [#allocation4], 0
      %s1038 = sshll.u32 [#allocation13], 4
      %s1039 = int_to_ptr.vmem [resolvable:$true] %s1038
      %s1040 = sshll.u32 %s20, 4
      %s1041 = int_to_ptr.hbm [resolvable:$true] %s1040
      %1043 = dma.vmem_to_hbm [thread:$0]  %s1039, 128, %s1041, [#allocation4]
    $region109: #{plain_generator_forward.2} parent=1 // pred_fallthru
      _
    // Predicated region
    $region110: #{plain_generator_forward.2} parent=1 // pred_check
      _
    $region111: #{plain_generator_forward.2} parent=1 // pred_check_branch
      %1045 = sbr.rel (0) target = $region113
    $region112: #{plain_generator_forward.2} parent=1 // pred_region
      _
    $region113: #{plain_generator_forward.2} parent=1 // pred_fallthru
      _
    // Predicated region
    $region114: #{plain_generator_forward.2} parent=1 // pred_check
      _
    $region115: #{plain_generator_forward.2} parent=1 // pred_check_branch
      %1047 = sbr.rel (0) target = $region117
    $region116: #{plain_generator_forward.2} parent=1 // pred_region
      _
    $region117: #{plain_generator_forward.2} parent=1 // pred_fallthru
      _
    // Predicated region
    $region118: #{plain_generator_forward.2} parent=1 // pred_check
      _
    $region119: #{plain_generator_forward.2} parent=1 // pred_check_branch
      %1049 = sbr.rel (0) target = $region121
    $region120: #{plain_generator_forward.2} parent=1 // pred_region
      _
    $region121: #{plain_generator_forward.2} parent=1 // pred_fallthru
      _
    // Predicated region
    $region122: #{plain_generator_forward.2} parent=1 // pred_check
      _
    $region123: #{plain_generator_forward.2} parent=1 // pred_check_branch
      %1051 = sbr.rel (0) target = $region125
    $region124: #{plain_generator_forward.2} parent=1 // pred_region
      %1053 = dma.done [#allocation4], 128
    $region125: #{plain_generator_forward.2} parent=1 // pred_fallthru
      _
    // Predicated region
    $region126: #{plain_generator_forward.2} parent=1 // pred_check
      _
    $region127: #{plain_generator_forward.2} parent=1 // pred_check_branch
      %1055 = sbr.rel (0) target = $region129
    $region128: #{plain_generator_forward.2} parent=1 // pred_region
      _
    $region129: #{plain_generator_forward.2} parent=1 // pred_fallthru
      _
    // Predicated region
    $region130: #{plain_generator_forward.2} parent=1 // pred_check
      _
    $region131: #{plain_generator_forward.2} parent=1 // pred_check_branch
      %1057 = sbr.rel (0) target = $region133
    $region132: #{plain_generator_forward.2} parent=1 // pred_region
      _
    $region133: #{plain_generator_forward.2} parent=1 // pred_fallthru
      _
    // Predicated region
    $region134: #{plain_generator_forward.2} parent=1 // pred_check
      _
    $region135: #{plain_generator_forward.2} parent=1 // pred_check_branch
      %1059 = sbr.rel (0) target = $region137
    $region136: #{plain_generator_forward.2} parent=1 // pred_region
      _
    $region137: #{plain_generator_forward.2} parent=1 // pred_fallthru
      _
    %1060 = vsyncpa [#allocation3], 1
    %1061 = vsyncpa [#allocation6], 1
    %1062 = vsyncpa [#allocation9], 1
    %1063 = vsyncpa [#allocation12], 1
    %1064 = vsyncpa [#allocation4], 1

</llo_original>
